<compile_context>
chip_gen: v5e
topology: v5e:2x2
jax: 0.10.0
libtpu: 0.0.40
codegen_flags: <defaults>
</compile_context>

<pallas_src>
import math

import numpy as np
import jax
import jax.numpy as jnp
from jax.experimental import pallas as pl
from jax.experimental.pallas import tpu as pltpu


# ----------------------------------------------------------------------------
# Gaussian kernel construction (mirrors the PyTorch __init__, incl. its quirk).
# ----------------------------------------------------------------------------
def _gaussian_1d_unnormalized(size, std):
    k = 2 * size + 1
    g = np.arange(k, dtype=np.float64)
    mean = (k - 1) / 2.0
    return (1.0 / (std * math.sqrt(2.0 * math.pi))) * np.exp(
        -(((g - mean) / (2.0 * std)) ** 2)
    )


def gaussian_kernels(size, sigma, dim=3):
    """Returns (k3d, [kd, kh, kw]): the full 3D kernel (PyTorch construction)
    and its exactly-equivalent normalized 1D factors (separable form)."""
    assert dim == 3 and len(sigma) == 3
    un = [_gaussian_1d_unnormalized(size, s) for s in sigma]
    k3d = np.einsum("i,j,k->ijk", *un)
    k3d = k3d / k3d.sum()
    factors = [u / u.sum() for u in un]  # outer(kd,kh,kw) == k3d exactly
    return k3d.astype(np.float32), [f.astype(np.float32) for f in factors]


def _band_right(k1d, n):
    """(n, n) Toeplitz band R with (x @ R) == 1D 'same' cross-correlation of x
    with k1d under zero padding: R[i, j] = k1d[i - j + p]."""
    k1d = np.asarray(k1d, np.float64)
    K = k1d.shape[0]
    p = (K - 1) // 2
    i = np.arange(n)[:, None]  # input index
    j = np.arange(n)[None, :]  # output index
    t = i - j + p
    valid = (t >= 0) & (t < K)
    return np.where(valid, k1d[np.clip(t, 0, K - 1)], 0.0)


# ----------------------------------------------------------------------------
# Pallas kernel: one batch element per grid step; two MXU matmuls per step.
# ----------------------------------------------------------------------------
def _blur_kernel(x_ref, mhw_ref, ld_ref, o_ref):
    # x_ref  : (1, D, H*W)  input slab, lane-dense along H*W
    # mhw_ref: (H*W, H*W)   fused H+W separable band matrix (right-multiply)
    # ld_ref : (D, D)       D-axis band matrix (left-multiply)
    # o_ref  : (1, D, H*W)
    y = jnp.dot(
        x_ref[0], mhw_ref[...],
        preferred_element_type=jnp.float32,
        precision=jax.lax.Precision.HIGHEST,
    )  # H and W passes on the MXU
    z = jnp.dot(
        ld_ref[...], y,
        preferred_element_type=jnp.float32,
        precision=jax.lax.Precision.HIGHEST,
    )  # D pass on the MXU
    o_ref[0] = z.astype(o_ref.dtype)


def gaussian_blur(x, k1d_d, k1d_h, k1d_w):
    """x: (N, D, H, W) f32; k1d_*: normalized 1D Gaussian factors (len 2*size+1)."""
    N, D, H, W = x.shape
    HW = H * W

    # Banded operators; zero padding is implicit in the band structure, so the
    # input never takes a padded round trip through HBM.
    r_w = _band_right(k1d_w, W)                        # (W, W)
    r_h = _band_right(k1d_h, H)                        # (H, H)
    m_hw = np.kron(r_h, r_w).astype(np.float32)        # (H*W, H*W): fused H+W pass
    l_d = _band_right(k1d_d, D).T.astype(np.float32)   # (D, D): left-multiply form
    # NOTE: the kron(H,W) fusion is sized for modest H*W (256 KiB of weights
    # here); for large volumes split into per-axis banded matmuls and tile D
    # into slabs to stay inside v7x's 64 MiB VMEM.

    x3 = x.reshape(N, D, HW)  # lane-dense presentation; wrapper-side, free

    out = pl.pallas_call(
        _blur_kernel,
        out_shape=jax.ShapeDtypeStruct((N, D, HW), x.dtype),
        grid=(N,),
        in_specs=[
            pl.BlockSpec((1, D, HW), lambda n: (n, 0, 0)),  # per-batch slab
            pl.BlockSpec((HW, HW), lambda n: (0, 0)),       # resident HW weights
            pl.BlockSpec((D, D), lambda n: (0, 0)),         # resident D weights
        ],
        out_specs=pl.BlockSpec((1, D, HW), lambda n: (n, 0, 0)),
        compiler_params=pltpu.CompilerParams(
            dimension_semantics=("parallel",),   # N>=2 -> both v7x TCs busy
            vmem_limit_bytes=32 * 1024 * 1024,
        ),
    )(x3, jnp.asarray(m_hw), jnp.asarray(l_d))
    return out.reshape(N, D, H, W)


# ----------------------------------------------------------------------------
# Reference (XLA conv3d) for correctness checking.
# ----------------------------------------------------------------------------
def gaussian_blur_reference(x, kernel3d):
    K = kernel3d.shape[-1]
    p = (K - 1) // 2
    out = jax.lax.conv_general_dilated(
        x[:, None],                         # (N, 1, D, H, W)
        jnp.asarray(kernel3d)[None, None],  # (1, 1, k, k, k) == torch weight, C=1
        window_strides=(1, 1, 1),
        padding=[(p, p)] * 3,
        dimension_numbers=("NCDHW", "OIDHW", "NCDHW"),
        precision=jax.lax.Precision.HIGHEST,
    )
    return out[:, 0]


if __name__ == "__main__":
    # Module config: gaussain_blur(size=2, sigma=[1.0, 0.8, 1.2], dim=3, channels=1)
    size = 2
    sigma = [1.0, 0.8, 1.2]
    k3d, (kd, kh, kw) = gaussian_kernels(size, sigma, dim=3)  # (5,5,5) + 1D factors

    # Input: (N, D, H, W) — PyTorch xx before unsqueeze(1).
    key = jax.random.PRNGKey(0)
    x = jax.random.normal(key, (2, 4, 16, 16), dtype=jnp.float32)

    out = jax.block_until_ready(gaussian_blur(x, kd, kh, kw))
    ref = gaussian_blur_reference(x, k3d)

    assert out.shape == x.shape
    # f32 / HIGHEST-precision MXU accumulation: observed diffs are ~1e-6; the
    # 1e-3 bound just leaves headroom for accumulation-order differences.
    assert jnp.allclose(out, ref, atol=1e-3, rtol=1e-3), (
        "mismatch vs XLA conv3d reference, max abs diff = "
        f"{float(jnp.max(jnp.abs(out - ref)))}"
    )
    print("KERNEL_OK")
</pallas_src>

<mosaic_0001>
module attributes {stable_mosaic.version = 11 : i64} {
  func.func @_blur_kernel(%arg0: i32, %arg1: memref<1x4x256xf32, #tpu.memory_space<vmem>>, %arg2: memref<256x256xf32, #tpu.memory_space<vmem>>, %arg3: memref<4x4xf32, #tpu.memory_space<vmem>>, %arg4: memref<1x4x256xf32, #tpu.memory_space<vmem>>) attributes {dimension_semantics = [#tpu.dimension_semantics<parallel>], iteration_bounds = array<i64: 2>, scalar_prefetch = 0 : i64, scratch_operands = 0 : i64, tpu.core_type = #tpu.core_type<tc>, window_params = [{transform_indices = @transform_0, window_bounds = array<i64: 1, 4, 256>}, {pipeline_mode = #tpu.pipeline_mode<synchronous>, transform_indices = @transform_1, window_bounds = array<i64: 256, 256>}, {pipeline_mode = #tpu.pipeline_mode<synchronous>, transform_indices = @transform_2, window_bounds = array<i64: 4, 4>}, {transform_indices = @transform_3, window_bounds = array<i64: 1, 4, 256>}]} {
    %c0 = arith.constant 0 : index
    %c0_0 = arith.constant 0 : index
    %c0_1 = arith.constant 0 : index
    %0 = vector.load %arg1[%c0, %c0_0, %c0_1] : memref<1x4x256xf32, #tpu.memory_space<vmem>>, vector<1x4x256xf32>
    %1 = vector.shape_cast %0 : vector<1x4x256xf32> to vector<4x256xf32>
    %c0_2 = arith.constant 0 : index
    %c0_3 = arith.constant 0 : index
    %2 = vector.load %arg2[%c0_2, %c0_3] : memref<256x256xf32, #tpu.memory_space<vmem>>, vector<256x256xf32>
    %cst = arith.constant dense<0.000000e+00> : vector<4x256xf32>
    %3 = tpu.matmul %1, %2, %cst {dimension_numbers = #tpu.dot_dimension_numbers<[1], [0], [0], [1], [0, 0, 1, 1], [], []>, precision = #tpu.contract_precision<fp32>} : vector<4x256xf32>, vector<256x256xf32>, vector<4x256xf32> -> vector<4x256xf32>
    %c0_4 = arith.constant 0 : index
    %c0_5 = arith.constant 0 : index
    %4 = vector.load %arg3[%c0_4, %c0_5] : memref<4x4xf32, #tpu.memory_space<vmem>>, vector<4x4xf32>
    %cst_6 = arith.constant dense<0.000000e+00> : vector<4x256xf32>
    %5 = tpu.matmul %4, %3, %cst_6 {dimension_numbers = #tpu.dot_dimension_numbers<[1], [0], [0], [1], [0, 0, 1, 1], [], []>, precision = #tpu.contract_precision<fp32>} : vector<4x4xf32>, vector<4x256xf32>, vector<4x256xf32> -> vector<4x256xf32>
    %c0_7 = arith.constant 0 : index
    %c0_8 = arith.constant 0 : index
    %c0_9 = arith.constant 0 : index
    %6 = vector.load %arg4[%c0_7, %c0_8, %c0_9] : memref<1x4x256xf32, #tpu.memory_space<vmem>>, vector<1x4x256xf32>
    %7 = vector.shape_cast %6 : vector<1x4x256xf32> to vector<4x256xf32>
    %8 = vector.shape_cast %5 : vector<4x256xf32> to vector<1x4x256xf32>
    tpu.vector_store %arg4[%c0_7, %c0_8, %c0_9], %8 {strides = array<i32>} : memref<1x4x256xf32, #tpu.memory_space<vmem>>, vector<1x4x256xf32>,
    return
  }
  func.func @transform_0(%arg0: i32) -> (i32, i32, i32) {
    %c0_i32 = arith.constant 0 : i32
    %c0_i32_0 = arith.constant 0 : i32
    %c0_i32_1 = arith.constant 0 : i32
    return %arg0, %c0_i32, %c0_i32_0 : i32, i32, i32
  }
  func.func @transform_1(%arg0: i32) -> (i32, i32) {
    %c0_i32 = arith.constant 0 : i32
    %c0_i32_0 = arith.constant 0 : i32
    %c0_i32_1 = arith.constant 0 : i32
    return %c0_i32, %c0_i32_0 : i32, i32
  }
  func.func @transform_2(%arg0: i32) -> (i32, i32) {
    %c0_i32 = arith.constant 0 : i32
    %c0_i32_0 = arith.constant 0 : i32
    %c0_i32_1 = arith.constant 0 : i32
    return %c0_i32, %c0_i32_0 : i32, i32
  }
  func.func @transform_3(%arg0: i32) -> (i32, i32, i32) {
    %c0_i32 = arith.constant 0 : i32
    %c0_i32_0 = arith.constant 0 : i32
    %c0_i32_1 = arith.constant 0 : i32
    return %arg0, %c0_i32, %c0_i32_0 : i32, i32, i32
  }
}

</mosaic_0001>

<llo_original>
// kernel: tpu_custom_call.1
$region0: #{tpu_custom_call.1}
  #allocation0 [shape = 'u32[]', space=smem, size = 0x4, offset = 0x4, fixed_abs, tag = 'smem constant byte address 0x4 - core index']
  #allocation1 [shape = 'u32[72,128]{1,0:T(1,128)}', space=vmem, size = 0x9000, scoped, tag = 'internal scratch']
  %s0 = inlined_call_operand.hbm [shape: f32[2,4,256], index: 0, kind: input, shape index: {}]
  %s1 = inlined_call_operand.hbm [shape: f32[256,256], index: 1, kind: input, shape index: {}]
  %s2 = inlined_call_operand.hbm [shape: f32[4,4], index: 2, kind: input, shape index: {}]
  %s3 = inlined_call_operand.hbm [shape: f32[2,4,256], index: 3, kind: output, shape index: {}]
  %s4 = sld [smem:[#allocation0]]
  $region57: #{tpu_custom_call.1} parent=0
    _
  %s6 = ssub.s32 1, %s4
  %s7 = scalar_select 0, %s6, %s4
  $region1: #{tpu_custom_call.1} parent=0
    #allocation2 [shape = 'u8[8192]{0}', space=vmem, size = 0x2000, scoped, tag = 'input window, operand 0']
    #allocation3 [shape = 's32[2]{0}', space=sflag, size = 0x8, scoped, tag = 'scoped memory for tpu_custom_call.1']
    #allocation4 [shape = 's32[2]{0}', space=sflag, size = 0x8, scoped, tag = 'scoped memory for tpu_custom_call.1']
    #allocation5 [shape = 'u8[262144]{0}', space=vmem, size = 0x40000, scoped, tag = 'input window, operand 1, single buffered']
    #allocation6 [shape = 's32[1]{0}', space=sflag, size = 0x4, scoped, tag = 'scoped memory for tpu_custom_call.1']
    #allocation7 [shape = 'u8[2048]{0}', space=vmem, size = 0x800, scoped, tag = 'input window, operand 2, single buffered']
    #allocation8 [shape = 'u8[8192]{0}', space=vmem, size = 0x2000, scoped, tag = 'output window, operand 0']
    %8 = vsyncpa [#allocation3], 0
    %s9 = scalar_lea.sflag [#allocation3], 1
    %10 = vsyncpa %s9, 0
    %11 = vsyncpa [#allocation6], 0
    %12 = vsyncpa [#allocation4], 0
    %s13 = scalar_lea.sflag [#allocation4], 1
    %14 = vsyncpa %s13, 0
    loop: start=0, step=1, limit=4
    $region2: #{tpu_custom_call.1} parent=1 // loop_pre_header
      _
    $region3: #{tpu_custom_call.1} parent=1 // loop_header
      %s16 = sphi 0, %s20
      %p17 = scmp.ge.s32.totalorder %s16, 4
      %s26 = sphi 0, %s28
      %s29 = sphi 0, %s26
      %s30 = sphi 0, %s29
      %s46 = sphi 0, %s30
      %s50 = sphi 0, %s50
      %s52 = sphi 0, %s50
      %s53 = sphi 0, %s52
      %s67 = sphi 0, %s53
      %s71 = sphi 0, %s71
      %s73 = sphi 0, %s71
      %s74 = sphi 0, %s73
      %s88 = sphi 0, %s74
      %s94 = sphi 0, %s96
      %s97 = sphi 0, %s94
      %s98 = sphi 0, %s97
      %s114 = sphi 0, %s98
    $region4: #{tpu_custom_call.1} parent=1 // loop_header_branch
      %19 = sbr.rel (%p17) target = $region8
    $region5: #{tpu_custom_call.1} parent=1 // loop_body
      %s21 = ssub.s32 %s16, 1
      %s22 = ssub.s32 %s16, 2
      %s23 = sadd.s32 %s16, 1
      %s24 = ssub.s32 %s16, %s23
      %p25 = scmp.eq.s32.totalorder %s24, 0
      %s27 = sadd.s32 %s26, 1
      %s28 = scalar_select %p25, %s26, %s27
      %p31 = pneg %p25
      %p32 = scmp.eq.s32.totalorder %s16, 1
      %p33 = por %p31, %p32
      %p34 = scmp.ne.s32.totalorder %s26, %s29
      %p35 = scmp.eq.s32.totalorder %s16, 0
      %p36 = por %p34, %p35
      %p37 = scmp.ne.s32.totalorder %s26, %s29
      %p38 = scmp.eq.s32.totalorder %s21, 1
      %p39 = por %p37, %p38
      %p40 = scmp.ne.s32.totalorder %s29, %s30
      %p41 = scmp.eq.s32.totalorder %s21, 0
      %p42 = por %p40, %p41
      %p43 = scmp.ne.s32.totalorder %s29, %s30
      %p44 = scmp.eq.s32.totalorder %s22, 1
      %p45 = por %p43, %p44
      %p47 = scmp.ne.s32.totalorder %s30, %s46
      %p48 = scmp.eq.s32.totalorder %s22, 0
      %p49 = por %p47, %p48
      %s51 = sadd.s32 %s50, 1
      %p54 = scmp.eq.s32.totalorder %s16, 1
      %p55 = scmp.ne.s32.totalorder %s50, %s52
      %p56 = scmp.eq.s32.totalorder %s16, 0
      %p57 = por %p55, %p56
      %p58 = scmp.ne.s32.totalorder %s50, %s52
      %p59 = scmp.eq.s32.totalorder %s21, 1
      %p60 = por %p58, %p59
      %p61 = scmp.ne.s32.totalorder %s52, %s53
      %p62 = scmp.eq.s32.totalorder %s21, 0
      %p63 = por %p61, %p62
      %p64 = scmp.ne.s32.totalorder %s52, %s53
      %p65 = scmp.eq.s32.totalorder %s22, 1
      %p66 = por %p64, %p65
      %p68 = scmp.ne.s32.totalorder %s53, %s67
      %p69 = scmp.eq.s32.totalorder %s22, 0
      %p70 = por %p68, %p69
      %s72 = sadd.s32 %s71, 1
      %p75 = scmp.eq.s32.totalorder %s16, 1
      %p76 = scmp.ne.s32.totalorder %s71, %s73
      %p77 = scmp.eq.s32.totalorder %s16, 0
      %p78 = por %p76, %p77
      %p79 = scmp.ne.s32.totalorder %s71, %s73
      %p80 = scmp.eq.s32.totalorder %s21, 1
      %p81 = por %p79, %p80
      %p82 = scmp.ne.s32.totalorder %s73, %s74
      %p83 = scmp.eq.s32.totalorder %s21, 0
      %p84 = por %p82, %p83
      %p85 = scmp.ne.s32.totalorder %s73, %s74
      %p86 = scmp.eq.s32.totalorder %s22, 1
      %p87 = por %p85, %p86
      %p89 = scmp.ne.s32.totalorder %s74, %s88
      %p90 = scmp.eq.s32.totalorder %s22, 0
      %p91 = por %p89, %p90
      %s92 = ssub.s32 %s16, %s23
      %p93 = scmp.eq.s32.totalorder %s92, 0
      %s95 = sadd.s32 %s94, 1
      %s96 = scalar_select %p93, %s94, %s95
      %p99 = pneg %p93
      %p100 = scmp.eq.s32.totalorder %s16, 1
      %p101 = por %p99, %p100
      %p102 = scmp.ne.s32.totalorder %s94, %s97
      %p103 = scmp.eq.s32.totalorder %s16, 0
      %p104 = por %p102, %p103
      %p105 = scmp.ne.s32.totalorder %s94, %s97
      %p106 = scmp.eq.s32.totalorder %s21, 1
      %p107 = por %p105, %p106
      %p108 = scmp.ne.s32.totalorder %s97, %s98
      %p109 = scmp.eq.s32.totalorder %s21, 0
      %p110 = por %p108, %p109
      %p111 = scmp.ne.s32.totalorder %s97, %s98
      %p112 = scmp.eq.s32.totalorder %s22, 1
      %p113 = por %p111, %p112
      %p115 = scmp.ne.s32.totalorder %s98, %s114
      %p116 = scmp.eq.s32.totalorder %s22, 0
      %p117 = por %p115, %p116
      %p118 = scmp.le.s32.totalorder 1, %s16
      %p119 = scmp.lt.s32.totalorder %s16, 3
      %p120 = pnand %p118, %p119
      %p121 = pneg %p120
      // Predicated region
      $region9: #{tpu_custom_call.1} parent=5 // pred_check
        _
      $region10: #{tpu_custom_call.1} parent=5 // pred_check_branch
        %123 = sbr.rel (%p120) target = $region12
      $region11: #{tpu_custom_call.1} parent=5 // pred_region
        %s124 = ssub.s32 %s16, 1
        // Predicated region
        $region13: #{tpu_custom_call.1} parent=11 // pred_check
          %p125 = pneg %p63
        $region14: #{tpu_custom_call.1} parent=11 // pred_check_branch
          %127 = sbr.rel (%p125) target = $region16
        $region15: #{tpu_custom_call.1} parent=11 // pred_region
          %129 = vsyncadd [#allocation6], 0
          %s130 = sshll.u32 %s1, 4
          %s131 = int_to_ptr.hbm [resolvable:$true] %s130
          %s132 = sshll.u32 [#allocation5], 4
          %s133 = int_to_ptr.vmem [resolvable:$true] %s132
          %138 = dma.hbm_to_vmem [thread:$0]  %s131, 8192, %s133, [#allocation6], 256, 256, 16
        $region16: #{tpu_custom_call.1} parent=11 // pred_fallthru
          _
        // Predicated region
        $region17: #{tpu_custom_call.1} parent=11 // pred_check
          %p139 = pneg %p84
        $region18: #{tpu_custom_call.1} parent=11 // pred_check_branch
          %141 = sbr.rel (%p139) target = $region20
        $region19: #{tpu_custom_call.1} parent=11 // pred_region
          %143 = vsyncadd [#allocation6], 0
          %s145 = sshll.u32 %s2, 4
          %s146 = int_to_ptr.hbm [resolvable:$true] %s145
          %s147 = sshll.u32 [#allocation7], 4
          %s148 = int_to_ptr.vmem [resolvable:$true] %s147
          %150 = dma.hbm_to_vmem [thread:$0]  %s146, 64, %s148, [#allocation6]
        $region20: #{tpu_custom_call.1} parent=11 // pred_fallthru
          _
      $region12: #{tpu_custom_call.1} parent=5 // pred_fallthru
        _
      %p151 = scmp.lt.s32.totalorder %s16, 2
      // Predicated region
      $region21: #{tpu_custom_call.1} parent=5 // pred_check
        %p152 = pneg %p151
      $region22: #{tpu_custom_call.1} parent=5 // pred_check_branch
        %154 = sbr.rel (%p152) target = $region24
      $region23: #{tpu_custom_call.1} parent=5 // pred_region
        // Predicated region
        $region25: #{tpu_custom_call.1} parent=23 // pred_check
          %p155 = pneg %p36
        $region26: #{tpu_custom_call.1} parent=23 // pred_check_branch
          %157 = sbr.rel (%p155) target = $region28
        $region27: #{tpu_custom_call.1} parent=23 // pred_region
          %s158 = sand.u32 %s26, 1
          %s159 = scalar_lea.sflag [#allocation3], %s158
          %s160 = sand.u32 %s26, 1
          %s161 = smul.addr %s160, 8
          %s162 = scalar_lea.vmem [#allocation2], %s161
          %164 = vsyncadd %s159, 0
          %s165 = smul.addr %s16, 2
          %s166 = smul.addr %s165, 4
          %s167 = scalar_lea.hbm %s0, %s166
          %s169 = sshll.u32 %s167, 4
          %s170 = int_to_ptr.hbm [resolvable:$true] %s169
          %s171 = sshll.u32 %s162, 4
          %s172 = int_to_ptr.vmem [resolvable:$true] %s171
          %174 = dma.hbm_to_vmem [thread:$0]  %s170, 128, %s172, %s159
        $region28: #{tpu_custom_call.1} parent=23 // pred_fallthru
          _
      $region24: #{tpu_custom_call.1} parent=5 // pred_fallthru
        _
      %p175 = scmp.le.s32.totalorder 1, %s16
      %p176 = scmp.lt.s32.totalorder %s16, 3
      %p177 = pnand %p175, %p176
      %p178 = pneg %p177
      // Predicated region
      $region29: #{tpu_custom_call.1} parent=5 // pred_check
        _
      $region30: #{tpu_custom_call.1} parent=5 // pred_check_branch
        %180 = sbr.rel (%p177) target = $region32
      $region31: #{tpu_custom_call.1} parent=5 // pred_region
        %s181 = ssub.s32 %s16, 1
        %s182 = sand.u32 %s29, 1
        %s183 = scalar_lea.sflag [#allocation3], %s182
        %s184 = sand.u32 %s29, 1
        %s185 = smul.addr %s184, 8
        %s186 = scalar_lea.vmem [#allocation2], %s185
        // Predicated region
        $region33: #{tpu_custom_call.1} parent=31 // pred_check
          %p187 = pneg %p42
        $region34: #{tpu_custom_call.1} parent=31 // pred_check_branch
          %189 = sbr.rel (%p187) target = $region36
        $region35: #{tpu_custom_call.1} parent=31 // pred_region
          %191 = dma.done %s183, 128
        $region36: #{tpu_custom_call.1} parent=31 // pred_fallthru
          _
        // Predicated region
        $region37: #{tpu_custom_call.1} parent=31 // pred_check
          %p192 = pneg %p63
        $region38: #{tpu_custom_call.1} parent=31 // pred_check_branch
          %194 = sbr.rel (%p192) target = $region40
        $region39: #{tpu_custom_call.1} parent=31 // pred_region
          %196 = dma.done [#allocation6], 8192
        $region40: #{tpu_custom_call.1} parent=31 // pred_fallthru
          _
        // Predicated region
        $region41: #{tpu_custom_call.1} parent=31 // pred_check
          %p197 = pneg %p84
        $region42: #{tpu_custom_call.1} parent=31 // pred_check_branch
          %199 = sbr.rel (%p197) target = $region44
        $region43: #{tpu_custom_call.1} parent=31 // pred_region
          %201 = dma.done [#allocation6], 64
        $region44: #{tpu_custom_call.1} parent=31 // pred_fallthru
          _
        %s202 = sand.u32 %s29, 1
        %s203 = scalar_lea.sflag [#allocation3], %s202
        %s204 = sand.u32 %s29, 1
        %s205 = smul.addr %s204, 8
        %s206 = scalar_lea.vmem [#allocation2], %s205
        %p207 = pneg %p42
        %p208 = pneg %p39
        %p209 = pneg %p63
        %p210 = pneg %p60
        %p211 = pneg %p84
        %p212 = pneg %p81
        %p213 = pneg %p110
        %p214 = pneg %p107
        %s215 = sand.u32 %s97, 1
        %s216 = scalar_lea.sflag [#allocation4], %s215
        %s217 = sand.u32 %s97, 1
        %s218 = smul.addr %s217, 8
        %s219 = scalar_lea.vmem [#allocation8], %s218
        %v220 = vld [vmem:[%s186] sm:$0xff]
        %v221 = vld [vmem:[#allocation5] sm:$0xff]
        %v222 = vld [vmem:[#allocation5 + $0x8] sm:$0xff]
        %v223 = vld [vmem:[#allocation5 + $0x10] sm:$0xff]
        %v224 = vld [vmem:[#allocation5 + $0x18] sm:$0xff]
        %v225 = vld [vmem:[#allocation5 + $0x20] sm:$0xff]
        %v226 = vld [vmem:[#allocation5 + $0x28] sm:$0xff]
        %v227 = vld [vmem:[#allocation5 + $0x30] sm:$0xff]
        %v228 = vld [vmem:[#allocation5 + $0x38] sm:$0xff]
        %v229 = vld [vmem:[#allocation5 + $0x40] sm:$0xff]
        %v230 = vld [vmem:[#allocation5 + $0x48] sm:$0xff]
        %v231 = vld [vmem:[#allocation5 + $0x50] sm:$0xff]
        %v232 = vld [vmem:[#allocation5 + $0x58] sm:$0xff]
        %v233 = vld [vmem:[#allocation5 + $0x60] sm:$0xff]
        %v234 = vld [vmem:[#allocation5 + $0x68] sm:$0xff]
        %v235 = vld [vmem:[#allocation5 + $0x70] sm:$0xff]
        %v236 = vld [vmem:[#allocation5 + $0x78] sm:$0xff]
        %v237 = vld [vmem:[#allocation5 + $0x80] sm:$0xff]
        %v238 = vld [vmem:[#allocation5 + $0x88] sm:$0xff]
        %v239 = vld [vmem:[#allocation5 + $0x90] sm:$0xff]
        %v240 = vld [vmem:[#allocation5 + $0x98] sm:$0xff]
        %v241 = vld [vmem:[#allocation5 + $0xa0] sm:$0xff]
        %v242 = vld [vmem:[#allocation5 + $0xa8] sm:$0xff]
        %v243 = vld [vmem:[#allocation5 + $0xb0] sm:$0xff]
        %v244 = vld [vmem:[#allocation5 + $0xb8] sm:$0xff]
        %v245 = vld [vmem:[#allocation5 + $0xc0] sm:$0xff]
        %v246 = vld [vmem:[#allocation5 + $0xc8] sm:$0xff]
        %v247 = vld [vmem:[#allocation5 + $0xd0] sm:$0xff]
        %v248 = vld [vmem:[#allocation5 + $0xd8] sm:$0xff]
        %v249 = vld [vmem:[#allocation5 + $0xe0] sm:$0xff]
        %v250 = vld [vmem:[#allocation5 + $0xe8] sm:$0xff]
        %v251 = vld [vmem:[#allocation5 + $0xf0] sm:$0xff]
        %v252 = vld [vmem:[#allocation5 + $0xf8] sm:$0xff]
        %v253 = vld [vmem:[#allocation5 + $0x100] sm:$0xff]
        %v254 = vld [vmem:[#allocation5 + $0x108] sm:$0xff]
        %v255 = vld [vmem:[#allocation5 + $0x110] sm:$0xff]
        %v256 = vld [vmem:[#allocation5 + $0x118] sm:$0xff]
        %v257 = vld [vmem:[#allocation5 + $0x120] sm:$0xff]
        %v258 = vld [vmem:[#allocation5 + $0x128] sm:$0xff]
        %v259 = vld [vmem:[#allocation5 + $0x130] sm:$0xff]
        %v260 = vld [vmem:[#allocation5 + $0x138] sm:$0xff]
        %v261 = vld [vmem:[#allocation5 + $0x140] sm:$0xff]
        %v262 = vld [vmem:[#allocation5 + $0x148] sm:$0xff]
        %v263 = vld [vmem:[#allocation5 + $0x150] sm:$0xff]
        %v264 = vld [vmem:[#allocation5 + $0x158] sm:$0xff]
        %v265 = vld [vmem:[#allocation5 + $0x160] sm:$0xff]
        %v266 = vld [vmem:[#allocation5 + $0x168] sm:$0xff]
        %v267 = vld [vmem:[#allocation5 + $0x170] sm:$0xff]
        %v268 = vld [vmem:[#allocation5 + $0x178] sm:$0xff]
        %v269 = vld [vmem:[#allocation5 + $0x180] sm:$0xff]
        %v270 = vld [vmem:[#allocation5 + $0x188] sm:$0xff]
        %v271 = vld [vmem:[#allocation5 + $0x190] sm:$0xff]
        %v272 = vld [vmem:[#allocation5 + $0x198] sm:$0xff]
        %v273 = vld [vmem:[#allocation5 + $0x1a0] sm:$0xff]
        %v274 = vld [vmem:[#allocation5 + $0x1a8] sm:$0xff]
        %v275 = vld [vmem:[#allocation5 + $0x1b0] sm:$0xff]
        %v276 = vld [vmem:[#allocation5 + $0x1b8] sm:$0xff]
        %v277 = vld [vmem:[#allocation5 + $0x1c0] sm:$0xff]
        %v278 = vld [vmem:[#allocation5 + $0x1c8] sm:$0xff]
        %v279 = vld [vmem:[#allocation5 + $0x1d0] sm:$0xff]
        %v280 = vld [vmem:[#allocation5 + $0x1d8] sm:$0xff]
        %v281 = vld [vmem:[#allocation5 + $0x1e0] sm:$0xff]
        %v282 = vld [vmem:[#allocation5 + $0x1e8] sm:$0xff]
        %v283 = vld [vmem:[#allocation5 + $0x1f0] sm:$0xff]
        %v284 = vld [vmem:[#allocation5 + $0x1f8] sm:$0xff]
        %286 = vst [vmem:[#allocation1] ss:$2 sm:$0xff] %v220
        %v287 = vld.sshfl [vmem:[#allocation1] sm:$0xff pattern:$0x75316420]
        %v288 = vld.sshfl [vmem:[#allocation1 + $0x8] sm:$0xff pattern:$0x75316420]
        %v291 = vand.u32 %v251, 4294901760
        %292 = vmatpush.msra.mxu0 %v291
        %v293 = vand.u32 %v249, 4294901760
        %294 = vmatpush.msra.mxu0 %v293
        %v295 = vand.u32 %v247, 4294901760
        %296 = vmatpush.msra.mxu0 %v295
        %v297 = vand.u32 %v245, 4294901760
        %298 = vmatpush.msra.mxu0 %v297
        %v299 = vand.u32 %v243, 4294901760
        %300 = vmatpush.msra.mxu0 %v299
        %v301 = vand.u32 %v241, 4294901760
        %302 = vmatpush.msra.mxu0 %v301
        %v303 = vand.u32 %v239, 4294901760
        %304 = vmatpush.msra.mxu0 %v303
        %v305 = vand.u32 %v237, 4294901760
        %306 = vmatpush.msra.mxu0 %v305
        %v307 = vand.u32 %v235, 4294901760
        %308 = vmatpush.msra.mxu0 %v307
        %v309 = vand.u32 %v233, 4294901760
        %310 = vmatpush.msra.mxu0 %v309
        %v311 = vand.u32 %v231, 4294901760
        %312 = vmatpush.msra.mxu0 %v311
        %v313 = vand.u32 %v229, 4294901760
        %314 = vmatpush.msra.mxu0 %v313
        %v315 = vand.u32 %v227, 4294901760
        %316 = vmatpush.msra.mxu0 %v315
        %v317 = vand.u32 %v225, 4294901760
        %318 = vmatpush.msra.mxu0 %v317
        %v319 = vand.u32 %v223, 4294901760
        %320 = vmatpush.msra.mxu0 %v319
        %v321 = vand.u32 %v221, 4294901760
        %322 = vmatpush.msra.mxu0 %v321
        %v323 = vand.u32 %v287, 4294901760
        %v324 = vsub.f32 %v287, %v323
        %v325 = vand.u32 %v324, 4294901760
        %v326 = vsub.f32 %v324, %v325
        %v327 = vand.u32 %v326, 4294901760
        %328 = vmatmul.f32.gmra.mxu0 %v327
        %v329 = vpop.f32.mrf.mxu0
        %v330 = vadd.f32 0.0, %v329
        %331 = vdwg.mxu0
        %v332 = vand.u32 %v251, 4294901760
        %v333 = vsub.f32 %v251, %v332
        %v334 = vand.u32 %v333, 4294901760
        %v335 = vsub.f32 %v333, %v334
        %v336 = vand.u32 %v335, 4294901760
        %337 = vmatpush.msra.mxu0 %v336
        %v338 = vand.u32 %v249, 4294901760
        %v339 = vsub.f32 %v249, %v338
        %v340 = vand.u32 %v339, 4294901760
        %v341 = vsub.f32 %v339, %v340
        %v342 = vand.u32 %v341, 4294901760
        %343 = vmatpush.msra.mxu0 %v342
        %v344 = vand.u32 %v247, 4294901760
        %v345 = vsub.f32 %v247, %v344
        %v346 = vand.u32 %v345, 4294901760
        %v347 = vsub.f32 %v345, %v346
        %v348 = vand.u32 %v347, 4294901760
        %349 = vmatpush.msra.mxu0 %v348
        %v350 = vand.u32 %v245, 4294901760
        %v351 = vsub.f32 %v245, %v350
        %v352 = vand.u32 %v351, 4294901760
        %v353 = vsub.f32 %v351, %v352
        %v354 = vand.u32 %v353, 4294901760
        %355 = vmatpush.msra.mxu0 %v354
        %v356 = vand.u32 %v243, 4294901760
        %v357 = vsub.f32 %v243, %v356
        %v358 = vand.u32 %v357, 4294901760
        %v359 = vsub.f32 %v357, %v358
        %v360 = vand.u32 %v359, 4294901760
        %361 = vmatpush.msra.mxu0 %v360
        %v362 = vand.u32 %v241, 4294901760
        %v363 = vsub.f32 %v241, %v362
        %v364 = vand.u32 %v363, 4294901760
        %v365 = vsub.f32 %v363, %v364
        %v366 = vand.u32 %v365, 4294901760
        %367 = vmatpush.msra.mxu0 %v366
        %v368 = vand.u32 %v239, 4294901760
        %v369 = vsub.f32 %v239, %v368
        %v370 = vand.u32 %v369, 4294901760
        %v371 = vsub.f32 %v369, %v370
        %v372 = vand.u32 %v371, 4294901760
        %373 = vmatpush.msra.mxu0 %v372
        %v374 = vand.u32 %v237, 4294901760
        %v375 = vsub.f32 %v237, %v374
        %v376 = vand.u32 %v375, 4294901760
        %v377 = vsub.f32 %v375, %v376
        %v378 = vand.u32 %v377, 4294901760
        %379 = vmatpush.msra.mxu0 %v378
        %v380 = vand.u32 %v235, 4294901760
        %v381 = vsub.f32 %v235, %v380
        %v382 = vand.u32 %v381, 4294901760
        %v383 = vsub.f32 %v381, %v382
        %v384 = vand.u32 %v383, 4294901760
        %385 = vmatpush.msra.mxu0 %v384
        %v386 = vand.u32 %v233, 4294901760
        %v387 = vsub.f32 %v233, %v386
        %v388 = vand.u32 %v387, 4294901760
        %v389 = vsub.f32 %v387, %v388
        %v390 = vand.u32 %v389, 4294901760
        %391 = vmatpush.msra.mxu0 %v390
        %v392 = vand.u32 %v231, 4294901760
        %v393 = vsub.f32 %v231, %v392
        %v394 = vand.u32 %v393, 4294901760
        %v395 = vsub.f32 %v393, %v394
        %v396 = vand.u32 %v395, 4294901760
        %397 = vmatpush.msra.mxu0 %v396
        %v398 = vand.u32 %v229, 4294901760
        %v399 = vsub.f32 %v229, %v398
        %v400 = vand.u32 %v399, 4294901760
        %v401 = vsub.f32 %v399, %v400
        %v402 = vand.u32 %v401, 4294901760
        %403 = vmatpush.msra.mxu0 %v402
        %v404 = vand.u32 %v227, 4294901760
        %v405 = vsub.f32 %v227, %v404
        %v406 = vand.u32 %v405, 4294901760
        %v407 = vsub.f32 %v405, %v406
        %v408 = vand.u32 %v407, 4294901760
        %409 = vmatpush.msra.mxu0 %v408
        %v410 = vand.u32 %v225, 4294901760
        %v411 = vsub.f32 %v225, %v410
        %v412 = vand.u32 %v411, 4294901760
        %v413 = vsub.f32 %v411, %v412
        %v414 = vand.u32 %v413, 4294901760
        %415 = vmatpush.msra.mxu0 %v414
        %v416 = vand.u32 %v223, 4294901760
        %v417 = vsub.f32 %v223, %v416
        %v418 = vand.u32 %v417, 4294901760
        %v419 = vsub.f32 %v417, %v418
        %v420 = vand.u32 %v419, 4294901760
        %421 = vmatpush.msra.mxu0 %v420
        %v422 = vand.u32 %v221, 4294901760
        %v423 = vsub.f32 %v221, %v422
        %v424 = vand.u32 %v423, 4294901760
        %v425 = vsub.f32 %v423, %v424
        %v426 = vand.u32 %v425, 4294901760
        %427 = vmatpush.msra.mxu0 %v426
        %v428 = vand.u32 %v287, 4294901760
        %429 = vmatmul.f32.gmra.mxu0 %v428
        %v430 = vpop.f32.mrf.mxu0
        %v431 = vadd.f32 %v330, %v430
        %432 = vdwg.mxu0
        %v433 = vand.u32 %v251, 4294901760
        %v434 = vsub.f32 %v251, %v433
        %435 = vmatpush.msra.mxu0 %v434
        %v436 = vand.u32 %v249, 4294901760
        %v437 = vsub.f32 %v249, %v436
        %438 = vmatpush.msra.mxu0 %v437
        %v439 = vand.u32 %v247, 4294901760
        %v440 = vsub.f32 %v247, %v439
        %441 = vmatpush.msra.mxu0 %v440
        %v442 = vand.u32 %v245, 4294901760
        %v443 = vsub.f32 %v245, %v442
        %444 = vmatpush.msra.mxu0 %v443
        %v445 = vand.u32 %v243, 4294901760
        %v446 = vsub.f32 %v243, %v445
        %447 = vmatpush.msra.mxu0 %v446
        %v448 = vand.u32 %v241, 4294901760
        %v449 = vsub.f32 %v241, %v448
        %450 = vmatpush.msra.mxu0 %v449
        %v451 = vand.u32 %v239, 4294901760
        %v452 = vsub.f32 %v239, %v451
        %453 = vmatpush.msra.mxu0 %v452
        %v454 = vand.u32 %v237, 4294901760
        %v455 = vsub.f32 %v237, %v454
        %456 = vmatpush.msra.mxu0 %v455
        %v457 = vand.u32 %v235, 4294901760
        %v458 = vsub.f32 %v235, %v457
        %459 = vmatpush.msra.mxu0 %v458
        %v460 = vand.u32 %v233, 4294901760
        %v461 = vsub.f32 %v233, %v460
        %462 = vmatpush.msra.mxu0 %v461
        %v463 = vand.u32 %v231, 4294901760
        %v464 = vsub.f32 %v231, %v463
        %465 = vmatpush.msra.mxu0 %v464
        %v466 = vand.u32 %v229, 4294901760
        %v467 = vsub.f32 %v229, %v466
        %468 = vmatpush.msra.mxu0 %v467
        %v469 = vand.u32 %v227, 4294901760
        %v470 = vsub.f32 %v227, %v469
        %471 = vmatpush.msra.mxu0 %v470
        %v472 = vand.u32 %v225, 4294901760
        %v473 = vsub.f32 %v225, %v472
        %474 = vmatpush.msra.mxu0 %v473
        %v475 = vand.u32 %v223, 4294901760
        %v476 = vsub.f32 %v223, %v475
        %477 = vmatpush.msra.mxu0 %v476
        %v478 = vand.u32 %v221, 4294901760
        %v479 = vsub.f32 %v221, %v478
        %480 = vmatpush.msra.mxu0 %v479
        %v481 = vand.u32 %v287, 4294901760
        %v482 = vsub.f32 %v287, %v481
        %483 = vmatmul.f32.gmra.mxu0 %v482
        %v484 = vpop.f32.mrf.mxu0
        %v485 = vadd.f32 %v431, %v484
        %486 = vdwg.mxu0
        %v487 = vand.u32 %v251, 4294901760
        %488 = vmatpush.msra.mxu0 %v487
        %v489 = vand.u32 %v249, 4294901760
        %490 = vmatpush.msra.mxu0 %v489
        %v491 = vand.u32 %v247, 4294901760
        %492 = vmatpush.msra.mxu0 %v491
        %v493 = vand.u32 %v245, 4294901760
        %494 = vmatpush.msra.mxu0 %v493
        %v495 = vand.u32 %v243, 4294901760
        %496 = vmatpush.msra.mxu0 %v495
        %v497 = vand.u32 %v241, 4294901760
        %498 = vmatpush.msra.mxu0 %v497
        %v499 = vand.u32 %v239, 4294901760
        %500 = vmatpush.msra.mxu0 %v499
        %v501 = vand.u32 %v237, 4294901760
        %502 = vmatpush.msra.mxu0 %v501
        %v503 = vand.u32 %v235, 4294901760
        %504 = vmatpush.msra.mxu0 %v503
        %v505 = vand.u32 %v233, 4294901760
        %506 = vmatpush.msra.mxu0 %v505
        %v507 = vand.u32 %v231, 4294901760
        %508 = vmatpush.msra.mxu0 %v507
        %v509 = vand.u32 %v229, 4294901760
        %510 = vmatpush.msra.mxu0 %v509
        %v511 = vand.u32 %v227, 4294901760
        %512 = vmatpush.msra.mxu0 %v511
        %v513 = vand.u32 %v225, 4294901760
        %514 = vmatpush.msra.mxu0 %v513
        %v515 = vand.u32 %v223, 4294901760
        %516 = vmatpush.msra.mxu0 %v515
        %v517 = vand.u32 %v221, 4294901760
        %518 = vmatpush.msra.mxu0 %v517
        %v519 = vand.u32 %v287, 4294901760
        %v520 = vsub.f32 %v287, %v519
        %v521 = vand.u32 %v520, 4294901760
        %522 = vmatmul.f32.gmra.mxu0 %v521
        %v523 = vpop.f32.mrf.mxu0
        %v524 = vadd.f32 %v485, %v523
        %525 = vdwg.mxu0
        %v526 = vand.u32 %v251, 4294901760
        %v527 = vsub.f32 %v251, %v526
        %v528 = vand.u32 %v527, 4294901760
        %529 = vmatpush.msra.mxu0 %v528
        %v530 = vand.u32 %v249, 4294901760
        %v531 = vsub.f32 %v249, %v530
        %v532 = vand.u32 %v531, 4294901760
        %533 = vmatpush.msra.mxu0 %v532
        %v534 = vand.u32 %v247, 4294901760
        %v535 = vsub.f32 %v247, %v534
        %v536 = vand.u32 %v535, 4294901760
        %537 = vmatpush.msra.mxu0 %v536
        %v538 = vand.u32 %v245, 4294901760
        %v539 = vsub.f32 %v245, %v538
        %v540 = vand.u32 %v539, 4294901760
        %541 = vmatpush.msra.mxu0 %v540
        %v542 = vand.u32 %v243, 4294901760
        %v543 = vsub.f32 %v243, %v542
        %v544 = vand.u32 %v543, 4294901760
        %545 = vmatpush.msra.mxu0 %v544
        %v546 = vand.u32 %v241, 4294901760
        %v547 = vsub.f32 %v241, %v546
        %v548 = vand.u32 %v547, 4294901760
        %549 = vmatpush.msra.mxu0 %v548
        %v550 = vand.u32 %v239, 4294901760
        %v551 = vsub.f32 %v239, %v550
        %v552 = vand.u32 %v551, 4294901760
        %553 = vmatpush.msra.mxu0 %v552
        %v554 = vand.u32 %v237, 4294901760
        %v555 = vsub.f32 %v237, %v554
        %v556 = vand.u32 %v555, 4294901760
        %557 = vmatpush.msra.mxu0 %v556
        %v558 = vand.u32 %v235, 4294901760
        %v559 = vsub.f32 %v235, %v558
        %v560 = vand.u32 %v559, 4294901760
        %561 = vmatpush.msra.mxu0 %v560
        %v562 = vand.u32 %v233, 4294901760
        %v563 = vsub.f32 %v233, %v562
        %v564 = vand.u32 %v563, 4294901760
        %565 = vmatpush.msra.mxu0 %v564
        %v566 = vand.u32 %v231, 4294901760
        %v567 = vsub.f32 %v231, %v566
        %v568 = vand.u32 %v567, 4294901760
        %569 = vmatpush.msra.mxu0 %v568
        %v570 = vand.u32 %v229, 4294901760
        %v571 = vsub.f32 %v229, %v570
        %v572 = vand.u32 %v571, 4294901760
        %573 = vmatpush.msra.mxu0 %v572
        %v574 = vand.u32 %v227, 4294901760
        %v575 = vsub.f32 %v227, %v574
        %v576 = vand.u32 %v575, 4294901760
        %577 = vmatpush.msra.mxu0 %v576
        %v578 = vand.u32 %v225, 4294901760
        %v579 = vsub.f32 %v225, %v578
        %v580 = vand.u32 %v579, 4294901760
        %581 = vmatpush.msra.mxu0 %v580
        %v582 = vand.u32 %v223, 4294901760
        %v583 = vsub.f32 %v223, %v582
        %v584 = vand.u32 %v583, 4294901760
        %585 = vmatpush.msra.mxu0 %v584
        %v586 = vand.u32 %v221, 4294901760
        %v587 = vsub.f32 %v221, %v586
        %v588 = vand.u32 %v587, 4294901760
        %589 = vmatpush.msra.mxu0 %v588
        %v590 = vand.u32 %v287, 4294901760
        %591 = vmatmul.f32.gmra.mxu0 %v590
        %v592 = vpop.f32.mrf.mxu0
        %v593 = vadd.f32 %v524, %v592
        %594 = vdwg.mxu0
        %v595 = vand.u32 %v251, 4294901760
        %596 = vmatpush.msra.mxu0 %v595
        %v597 = vand.u32 %v249, 4294901760
        %598 = vmatpush.msra.mxu0 %v597
        %v599 = vand.u32 %v247, 4294901760
        %600 = vmatpush.msra.mxu0 %v599
        %v601 = vand.u32 %v245, 4294901760
        %602 = vmatpush.msra.mxu0 %v601
        %v603 = vand.u32 %v243, 4294901760
        %604 = vmatpush.msra.mxu0 %v603
        %v605 = vand.u32 %v241, 4294901760
        %606 = vmatpush.msra.mxu0 %v605
        %v607 = vand.u32 %v239, 4294901760
        %608 = vmatpush.msra.mxu0 %v607
        %v609 = vand.u32 %v237, 4294901760
        %610 = vmatpush.msra.mxu0 %v609
        %v611 = vand.u32 %v235, 4294901760
        %612 = vmatpush.msra.mxu0 %v611
        %v613 = vand.u32 %v233, 4294901760
        %614 = vmatpush.msra.mxu0 %v613
        %v615 = vand.u32 %v231, 4294901760
        %616 = vmatpush.msra.mxu0 %v615
        %v617 = vand.u32 %v229, 4294901760
        %618 = vmatpush.msra.mxu0 %v617
        %v619 = vand.u32 %v227, 4294901760
        %620 = vmatpush.msra.mxu0 %v619
        %v621 = vand.u32 %v225, 4294901760
        %622 = vmatpush.msra.mxu0 %v621
        %v623 = vand.u32 %v223, 4294901760
        %624 = vmatpush.msra.mxu0 %v623
        %v625 = vand.u32 %v221, 4294901760
        %626 = vmatpush.msra.mxu0 %v625
        %v627 = vand.u32 %v287, 4294901760
        %628 = vmatmul.f32.gmra.mxu0 %v627
        %v629 = vpop.f32.mrf.mxu0
        %v630 = vadd.f32 %v593, %v629
        %631 = vdwg.mxu0
        %v632 = vand.u32 %v283, 4294901760
        %633 = vmatpush.msra.mxu0 %v632
        %v634 = vand.u32 %v281, 4294901760
        %635 = vmatpush.msra.mxu0 %v634
        %v636 = vand.u32 %v279, 4294901760
        %637 = vmatpush.msra.mxu0 %v636
        %v638 = vand.u32 %v277, 4294901760
        %639 = vmatpush.msra.mxu0 %v638
        %v640 = vand.u32 %v275, 4294901760
        %641 = vmatpush.msra.mxu0 %v640
        %v642 = vand.u32 %v273, 4294901760
        %643 = vmatpush.msra.mxu0 %v642
        %v644 = vand.u32 %v271, 4294901760
        %645 = vmatpush.msra.mxu0 %v644
        %v646 = vand.u32 %v269, 4294901760
        %647 = vmatpush.msra.mxu0 %v646
        %v648 = vand.u32 %v267, 4294901760
        %649 = vmatpush.msra.mxu0 %v648
        %v650 = vand.u32 %v265, 4294901760
        %651 = vmatpush.msra.mxu0 %v650
        %v652 = vand.u32 %v263, 4294901760
        %653 = vmatpush.msra.mxu0 %v652
        %v654 = vand.u32 %v261, 4294901760
        %655 = vmatpush.msra.mxu0 %v654
        %v656 = vand.u32 %v259, 4294901760
        %657 = vmatpush.msra.mxu0 %v656
        %v658 = vand.u32 %v257, 4294901760
        %659 = vmatpush.msra.mxu0 %v658
        %v660 = vand.u32 %v255, 4294901760
        %661 = vmatpush.msra.mxu0 %v660
        %v662 = vand.u32 %v253, 4294901760
        %663 = vmatpush.msra.mxu0 %v662
        %v664 = vand.u32 %v288, 4294901760
        %v665 = vsub.f32 %v288, %v664
        %v666 = vand.u32 %v665, 4294901760
        %v667 = vsub.f32 %v665, %v666
        %v668 = vand.u32 %v667, 4294901760
        %669 = vmatmul.f32.gmra.mxu0 %v668
        %v670 = vpop.f32.mrf.mxu0
        %v671 = vadd.f32 %v630, %v670
        %672 = vdwg.mxu0
        %v673 = vand.u32 %v283, 4294901760
        %v674 = vsub.f32 %v283, %v673
        %v675 = vand.u32 %v674, 4294901760
        %v676 = vsub.f32 %v674, %v675
        %v677 = vand.u32 %v676, 4294901760
        %678 = vmatpush.msra.mxu0 %v677
        %v679 = vand.u32 %v281, 4294901760
        %v680 = vsub.f32 %v281, %v679
        %v681 = vand.u32 %v680, 4294901760
        %v682 = vsub.f32 %v680, %v681
        %v683 = vand.u32 %v682, 4294901760
        %684 = vmatpush.msra.mxu0 %v683
        %v685 = vand.u32 %v279, 4294901760
        %v686 = vsub.f32 %v279, %v685
        %v687 = vand.u32 %v686, 4294901760
        %v688 = vsub.f32 %v686, %v687
        %v689 = vand.u32 %v688, 4294901760
        %690 = vmatpush.msra.mxu0 %v689
        %v691 = vand.u32 %v277, 4294901760
        %v692 = vsub.f32 %v277, %v691
        %v693 = vand.u32 %v692, 4294901760
        %v694 = vsub.f32 %v692, %v693
        %v695 = vand.u32 %v694, 4294901760
        %696 = vmatpush.msra.mxu0 %v695
        %v697 = vand.u32 %v275, 4294901760
        %v698 = vsub.f32 %v275, %v697
        %v699 = vand.u32 %v698, 4294901760
        %v700 = vsub.f32 %v698, %v699
        %v701 = vand.u32 %v700, 4294901760
        %702 = vmatpush.msra.mxu0 %v701
        %v703 = vand.u32 %v273, 4294901760
        %v704 = vsub.f32 %v273, %v703
        %v705 = vand.u32 %v704, 4294901760
        %v706 = vsub.f32 %v704, %v705
        %v707 = vand.u32 %v706, 4294901760
        %708 = vmatpush.msra.mxu0 %v707
        %v709 = vand.u32 %v271, 4294901760
        %v710 = vsub.f32 %v271, %v709
        %v711 = vand.u32 %v710, 4294901760
        %v712 = vsub.f32 %v710, %v711
        %v713 = vand.u32 %v712, 4294901760
        %714 = vmatpush.msra.mxu0 %v713
        %v715 = vand.u32 %v269, 4294901760
        %v716 = vsub.f32 %v269, %v715
        %v717 = vand.u32 %v716, 4294901760
        %v718 = vsub.f32 %v716, %v717
        %v719 = vand.u32 %v718, 4294901760
        %720 = vmatpush.msra.mxu0 %v719
        %v721 = vand.u32 %v267, 4294901760
        %v722 = vsub.f32 %v267, %v721
        %v723 = vand.u32 %v722, 4294901760
        %v724 = vsub.f32 %v722, %v723
        %v725 = vand.u32 %v724, 4294901760
        %726 = vmatpush.msra.mxu0 %v725
        %v727 = vand.u32 %v265, 4294901760
        %v728 = vsub.f32 %v265, %v727
        %v729 = vand.u32 %v728, 4294901760
        %v730 = vsub.f32 %v728, %v729
        %v731 = vand.u32 %v730, 4294901760
        %732 = vmatpush.msra.mxu0 %v731
        %v733 = vand.u32 %v263, 4294901760
        %v734 = vsub.f32 %v263, %v733
        %v735 = vand.u32 %v734, 4294901760
        %v736 = vsub.f32 %v734, %v735
        %v737 = vand.u32 %v736, 4294901760
        %738 = vmatpush.msra.mxu0 %v737
        %v739 = vand.u32 %v261, 4294901760
        %v740 = vsub.f32 %v261, %v739
        %v741 = vand.u32 %v740, 4294901760
        %v742 = vsub.f32 %v740, %v741
        %v743 = vand.u32 %v742, 4294901760
        %744 = vmatpush.msra.mxu0 %v743
        %v745 = vand.u32 %v259, 4294901760
        %v746 = vsub.f32 %v259, %v745
        %v747 = vand.u32 %v746, 4294901760
        %v748 = vsub.f32 %v746, %v747
        %v749 = vand.u32 %v748, 4294901760
        %750 = vmatpush.msra.mxu0 %v749
        %v751 = vand.u32 %v257, 4294901760
        %v752 = vsub.f32 %v257, %v751
        %v753 = vand.u32 %v752, 4294901760
        %v754 = vsub.f32 %v752, %v753
        %v755 = vand.u32 %v754, 4294901760
        %756 = vmatpush.msra.mxu0 %v755
        %v757 = vand.u32 %v255, 4294901760
        %v758 = vsub.f32 %v255, %v757
        %v759 = vand.u32 %v758, 4294901760
        %v760 = vsub.f32 %v758, %v759
        %v761 = vand.u32 %v760, 4294901760
        %762 = vmatpush.msra.mxu0 %v761
        %v763 = vand.u32 %v253, 4294901760
        %v764 = vsub.f32 %v253, %v763
        %v765 = vand.u32 %v764, 4294901760
        %v766 = vsub.f32 %v764, %v765
        %v767 = vand.u32 %v766, 4294901760
        %768 = vmatpush.msra.mxu0 %v767
        %v769 = vand.u32 %v288, 4294901760
        %770 = vmatmul.f32.gmra.mxu0 %v769
        %v771 = vpop.f32.mrf.mxu0
        %v772 = vadd.f32 %v671, %v771
        %773 = vdwg.mxu0
        %v774 = vand.u32 %v283, 4294901760
        %v775 = vsub.f32 %v283, %v774
        %776 = vmatpush.msra.mxu0 %v775
        %v777 = vand.u32 %v281, 4294901760
        %v778 = vsub.f32 %v281, %v777
        %779 = vmatpush.msra.mxu0 %v778
        %v780 = vand.u32 %v279, 4294901760
        %v781 = vsub.f32 %v279, %v780
        %782 = vmatpush.msra.mxu0 %v781
        %v783 = vand.u32 %v277, 4294901760
        %v784 = vsub.f32 %v277, %v783
        %785 = vmatpush.msra.mxu0 %v784
        %v786 = vand.u32 %v275, 4294901760
        %v787 = vsub.f32 %v275, %v786
        %788 = vmatpush.msra.mxu0 %v787
        %v789 = vand.u32 %v273, 4294901760
        %v790 = vsub.f32 %v273, %v789
        %791 = vmatpush.msra.mxu0 %v790
        %v792 = vand.u32 %v271, 4294901760
        %v793 = vsub.f32 %v271, %v792
        %794 = vmatpush.msra.mxu0 %v793
        %v795 = vand.u32 %v269, 4294901760
        %v796 = vsub.f32 %v269, %v795
        %797 = vmatpush.msra.mxu0 %v796
        %v798 = vand.u32 %v267, 4294901760
        %v799 = vsub.f32 %v267, %v798
        %800 = vmatpush.msra.mxu0 %v799
        %v801 = vand.u32 %v265, 4294901760
        %v802 = vsub.f32 %v265, %v801
        %803 = vmatpush.msra.mxu0 %v802
        %v804 = vand.u32 %v263, 4294901760
        %v805 = vsub.f32 %v263, %v804
        %806 = vmatpush.msra.mxu0 %v805
        %v807 = vand.u32 %v261, 4294901760
        %v808 = vsub.f32 %v261, %v807
        %809 = vmatpush.msra.mxu0 %v808
        %v810 = vand.u32 %v259, 4294901760
        %v811 = vsub.f32 %v259, %v810
        %812 = vmatpush.msra.mxu0 %v811
        %v813 = vand.u32 %v257, 4294901760
        %v814 = vsub.f32 %v257, %v813
        %815 = vmatpush.msra.mxu0 %v814
        %v816 = vand.u32 %v255, 4294901760
        %v817 = vsub.f32 %v255, %v816
        %818 = vmatpush.msra.mxu0 %v817
        %v819 = vand.u32 %v253, 4294901760
        %v820 = vsub.f32 %v253, %v819
        %821 = vmatpush.msra.mxu0 %v820
        %v822 = vand.u32 %v288, 4294901760
        %v823 = vsub.f32 %v288, %v822
        %824 = vmatmul.f32.gmra.mxu0 %v823
        %v825 = vpop.f32.mrf.mxu0
        %v826 = vadd.f32 %v772, %v825
        %827 = vdwg.mxu0
        %v828 = vand.u32 %v283, 4294901760
        %829 = vmatpush.msra.mxu0 %v828
        %v830 = vand.u32 %v281, 4294901760
        %831 = vmatpush.msra.mxu0 %v830
        %v832 = vand.u32 %v279, 4294901760
        %833 = vmatpush.msra.mxu0 %v832
        %v834 = vand.u32 %v277, 4294901760
        %835 = vmatpush.msra.mxu0 %v834
        %v836 = vand.u32 %v275, 4294901760
        %837 = vmatpush.msra.mxu0 %v836
        %v838 = vand.u32 %v273, 4294901760
        %839 = vmatpush.msra.mxu0 %v838
        %v840 = vand.u32 %v271, 4294901760
        %841 = vmatpush.msra.mxu0 %v840
        %v842 = vand.u32 %v269, 4294901760
        %843 = vmatpush.msra.mxu0 %v842
        %v844 = vand.u32 %v267, 4294901760
        %845 = vmatpush.msra.mxu0 %v844
        %v846 = vand.u32 %v265, 4294901760
        %847 = vmatpush.msra.mxu0 %v846
        %v848 = vand.u32 %v263, 4294901760
        %849 = vmatpush.msra.mxu0 %v848
        %v850 = vand.u32 %v261, 4294901760
        %851 = vmatpush.msra.mxu0 %v850
        %v852 = vand.u32 %v259, 4294901760
        %853 = vmatpush.msra.mxu0 %v852
        %v854 = vand.u32 %v257, 4294901760
        %855 = vmatpush.msra.mxu0 %v854
        %v856 = vand.u32 %v255, 4294901760
        %857 = vmatpush.msra.mxu0 %v856
        %v858 = vand.u32 %v253, 4294901760
        %859 = vmatpush.msra.mxu0 %v858
        %v860 = vand.u32 %v288, 4294901760
        %v861 = vsub.f32 %v288, %v860
        %v862 = vand.u32 %v861, 4294901760
        %863 = vmatmul.f32.gmra.mxu0 %v862
        %v864 = vpop.f32.mrf.mxu0
        %v865 = vadd.f32 %v826, %v864
        %866 = vdwg.mxu0
        %v867 = vand.u32 %v283, 4294901760
        %v868 = vsub.f32 %v283, %v867
        %v869 = vand.u32 %v868, 4294901760
        %870 = vmatpush.msra.mxu0 %v869
        %v871 = vand.u32 %v281, 4294901760
        %v872 = vsub.f32 %v281, %v871
        %v873 = vand.u32 %v872, 4294901760
        %874 = vmatpush.msra.mxu0 %v873
        %v875 = vand.u32 %v279, 4294901760
        %v876 = vsub.f32 %v279, %v875
        %v877 = vand.u32 %v876, 4294901760
        %878 = vmatpush.msra.mxu0 %v877
        %v879 = vand.u32 %v277, 4294901760
        %v880 = vsub.f32 %v277, %v879
        %v881 = vand.u32 %v880, 4294901760
        %882 = vmatpush.msra.mxu0 %v881
        %v883 = vand.u32 %v275, 4294901760
        %v884 = vsub.f32 %v275, %v883
        %v885 = vand.u32 %v884, 4294901760
        %886 = vmatpush.msra.mxu0 %v885
        %v887 = vand.u32 %v273, 4294901760
        %v888 = vsub.f32 %v273, %v887
        %v889 = vand.u32 %v888, 4294901760
        %890 = vmatpush.msra.mxu0 %v889
        %v891 = vand.u32 %v271, 4294901760
        %v892 = vsub.f32 %v271, %v891
        %v893 = vand.u32 %v892, 4294901760
        %894 = vmatpush.msra.mxu0 %v893
        %v895 = vand.u32 %v269, 4294901760
        %v896 = vsub.f32 %v269, %v895
        %v897 = vand.u32 %v896, 4294901760
        %898 = vmatpush.msra.mxu0 %v897
        %v899 = vand.u32 %v267, 4294901760
        %v900 = vsub.f32 %v267, %v899
        %v901 = vand.u32 %v900, 4294901760
        %902 = vmatpush.msra.mxu0 %v901
        %v903 = vand.u32 %v265, 4294901760
        %v904 = vsub.f32 %v265, %v903
        %v905 = vand.u32 %v904, 4294901760
        %906 = vmatpush.msra.mxu0 %v905
        %v907 = vand.u32 %v263, 4294901760
        %v908 = vsub.f32 %v263, %v907
        %v909 = vand.u32 %v908, 4294901760
        %910 = vmatpush.msra.mxu0 %v909
        %v911 = vand.u32 %v261, 4294901760
        %v912 = vsub.f32 %v261, %v911
        %v913 = vand.u32 %v912, 4294901760
        %914 = vmatpush.msra.mxu0 %v913
        %v915 = vand.u32 %v259, 4294901760
        %v916 = vsub.f32 %v259, %v915
        %v917 = vand.u32 %v916, 4294901760
        %918 = vmatpush.msra.mxu0 %v917
        %v919 = vand.u32 %v257, 4294901760
        %v920 = vsub.f32 %v257, %v919
        %v921 = vand.u32 %v920, 4294901760
        %922 = vmatpush.msra.mxu0 %v921
        %v923 = vand.u32 %v255, 4294901760
        %v924 = vsub.f32 %v255, %v923
        %v925 = vand.u32 %v924, 4294901760
        %926 = vmatpush.msra.mxu0 %v925
        %v927 = vand.u32 %v253, 4294901760
        %v928 = vsub.f32 %v253, %v927
        %v929 = vand.u32 %v928, 4294901760
        %930 = vmatpush.msra.mxu0 %v929
        %v931 = vand.u32 %v288, 4294901760
        %932 = vmatmul.f32.gmra.mxu0 %v931
        %v933 = vpop.f32.mrf.mxu0
        %v934 = vadd.f32 %v865, %v933
        %935 = vdwg.mxu0
        %v936 = vand.u32 %v283, 4294901760
        %937 = vmatpush.msra.mxu0 %v936
        %v938 = vand.u32 %v281, 4294901760
        %939 = vmatpush.msra.mxu0 %v938
        %v940 = vand.u32 %v279, 4294901760
        %941 = vmatpush.msra.mxu0 %v940
        %v942 = vand.u32 %v277, 4294901760
        %943 = vmatpush.msra.mxu0 %v942
        %v944 = vand.u32 %v275, 4294901760
        %945 = vmatpush.msra.mxu0 %v944
        %v946 = vand.u32 %v273, 4294901760
        %947 = vmatpush.msra.mxu0 %v946
        %v948 = vand.u32 %v271, 4294901760
        %949 = vmatpush.msra.mxu0 %v948
        %v950 = vand.u32 %v269, 4294901760
        %951 = vmatpush.msra.mxu0 %v950
        %v952 = vand.u32 %v267, 4294901760
        %953 = vmatpush.msra.mxu0 %v952
        %v954 = vand.u32 %v265, 4294901760
        %955 = vmatpush.msra.mxu0 %v954
        %v956 = vand.u32 %v263, 4294901760
        %957 = vmatpush.msra.mxu0 %v956
        %v958 = vand.u32 %v261, 4294901760
        %959 = vmatpush.msra.mxu0 %v958
        %v960 = vand.u32 %v259, 4294901760
        %961 = vmatpush.msra.mxu0 %v960
        %v962 = vand.u32 %v257, 4294901760
        %963 = vmatpush.msra.mxu0 %v962
        %v964 = vand.u32 %v255, 4294901760
        %965 = vmatpush.msra.mxu0 %v964
        %v966 = vand.u32 %v253, 4294901760
        %967 = vmatpush.msra.mxu0 %v966
        %v968 = vand.u32 %v288, 4294901760
        %969 = vmatmul.f32.gmra.mxu0 %v968
        %v970 = vpop.f32.mrf.mxu0
        %v971 = vadd.f32 %v934, %v970
        %972 = vdwg.mxu0
        %v973 = vand.u32 %v252, 4294901760
        %974 = vmatpush.msra.mxu0 %v973
        %v975 = vand.u32 %v250, 4294901760
        %976 = vmatpush.msra.mxu0 %v975
        %v977 = vand.u32 %v248, 4294901760
        %978 = vmatpush.msra.mxu0 %v977
        %v979 = vand.u32 %v246, 4294901760
        %980 = vmatpush.msra.mxu0 %v979
        %v981 = vand.u32 %v244, 4294901760
        %982 = vmatpush.msra.mxu0 %v981
        %v983 = vand.u32 %v242, 4294901760
        %984 = vmatpush.msra.mxu0 %v983
        %v985 = vand.u32 %v240, 4294901760
        %986 = vmatpush.msra.mxu0 %v985
        %v987 = vand.u32 %v238, 4294901760
        %988 = vmatpush.msra.mxu0 %v987
        %v989 = vand.u32 %v236, 4294901760
        %990 = vmatpush.msra.mxu0 %v989
        %v991 = vand.u32 %v234, 4294901760
        %992 = vmatpush.msra.mxu0 %v991
        %v993 = vand.u32 %v232, 4294901760
        %994 = vmatpush.msra.mxu0 %v993
        %v995 = vand.u32 %v230, 4294901760
        %996 = vmatpush.msra.mxu0 %v995
        %v997 = vand.u32 %v228, 4294901760
        %998 = vmatpush.msra.mxu0 %v997
        %v999 = vand.u32 %v226, 4294901760
        %1000 = vmatpush.msra.mxu0 %v999
        %v1001 = vand.u32 %v224, 4294901760
        %1002 = vmatpush.msra.mxu0 %v1001
        %v1003 = vand.u32 %v222, 4294901760
        %1004 = vmatpush.msra.mxu0 %v1003
        %v1005 = vand.u32 %v287, 4294901760
        %v1006 = vsub.f32 %v287, %v1005
        %v1007 = vand.u32 %v1006, 4294901760
        %v1008 = vsub.f32 %v1006, %v1007
        %v1009 = vand.u32 %v1008, 4294901760
        %1010 = vmatmul.f32.gmra.mxu0 %v1009
        %v1011 = vpop.f32.mrf.mxu0
        %v1012 = vadd.f32 0.0, %v1011
        %1013 = vdwg.mxu0
        %v1014 = vand.u32 %v252, 4294901760
        %v1015 = vsub.f32 %v252, %v1014
        %v1016 = vand.u32 %v1015, 4294901760
        %v1017 = vsub.f32 %v1015, %v1016
        %v1018 = vand.u32 %v1017, 4294901760
        %1019 = vmatpush.msra.mxu0 %v1018
        %v1020 = vand.u32 %v250, 4294901760
        %v1021 = vsub.f32 %v250, %v1020
        %v1022 = vand.u32 %v1021, 4294901760
        %v1023 = vsub.f32 %v1021, %v1022
        %v1024 = vand.u32 %v1023, 4294901760
        %1025 = vmatpush.msra.mxu0 %v1024
        %v1026 = vand.u32 %v248, 4294901760
        %v1027 = vsub.f32 %v248, %v1026
        %v1028 = vand.u32 %v1027, 4294901760
        %v1029 = vsub.f32 %v1027, %v1028
        %v1030 = vand.u32 %v1029, 4294901760
        %1031 = vmatpush.msra.mxu0 %v1030
        %v1032 = vand.u32 %v246, 4294901760
        %v1033 = vsub.f32 %v246, %v1032
        %v1034 = vand.u32 %v1033, 4294901760
        %v1035 = vsub.f32 %v1033, %v1034
        %v1036 = vand.u32 %v1035, 4294901760
        %1037 = vmatpush.msra.mxu0 %v1036
        %v1038 = vand.u32 %v244, 4294901760
        %v1039 = vsub.f32 %v244, %v1038
        %v1040 = vand.u32 %v1039, 4294901760
        %v1041 = vsub.f32 %v1039, %v1040
        %v1042 = vand.u32 %v1041, 4294901760
        %1043 = vmatpush.msra.mxu0 %v1042
        %v1044 = vand.u32 %v242, 4294901760
        %v1045 = vsub.f32 %v242, %v1044
        %v1046 = vand.u32 %v1045, 4294901760
        %v1047 = vsub.f32 %v1045, %v1046
        %v1048 = vand.u32 %v1047, 4294901760
        %1049 = vmatpush.msra.mxu0 %v1048
        %v1050 = vand.u32 %v240, 4294901760
        %v1051 = vsub.f32 %v240, %v1050
        %v1052 = vand.u32 %v1051, 4294901760
        %v1053 = vsub.f32 %v1051, %v1052
        %v1054 = vand.u32 %v1053, 4294901760
        %1055 = vmatpush.msra.mxu0 %v1054
        %v1056 = vand.u32 %v238, 4294901760
        %v1057 = vsub.f32 %v238, %v1056
        %v1058 = vand.u32 %v1057, 4294901760
        %v1059 = vsub.f32 %v1057, %v1058
        %v1060 = vand.u32 %v1059, 4294901760
        %1061 = vmatpush.msra.mxu0 %v1060
        %v1062 = vand.u32 %v236, 4294901760
        %v1063 = vsub.f32 %v236, %v1062
        %v1064 = vand.u32 %v1063, 4294901760
        %v1065 = vsub.f32 %v1063, %v1064
        %v1066 = vand.u32 %v1065, 4294901760
        %1067 = vmatpush.msra.mxu0 %v1066
        %v1068 = vand.u32 %v234, 4294901760
        %v1069 = vsub.f32 %v234, %v1068
        %v1070 = vand.u32 %v1069, 4294901760
        %v1071 = vsub.f32 %v1069, %v1070
        %v1072 = vand.u32 %v1071, 4294901760
        %1073 = vmatpush.msra.mxu0 %v1072
        %v1074 = vand.u32 %v232, 4294901760
        %v1075 = vsub.f32 %v232, %v1074
        %v1076 = vand.u32 %v1075, 4294901760
        %v1077 = vsub.f32 %v1075, %v1076
        %v1078 = vand.u32 %v1077, 4294901760
        %1079 = vmatpush.msra.mxu0 %v1078
        %v1080 = vand.u32 %v230, 4294901760
        %v1081 = vsub.f32 %v230, %v1080
        %v1082 = vand.u32 %v1081, 4294901760
        %v1083 = vsub.f32 %v1081, %v1082
        %v1084 = vand.u32 %v1083, 4294901760
        %1085 = vmatpush.msra.mxu0 %v1084
        %v1086 = vand.u32 %v228, 4294901760
        %v1087 = vsub.f32 %v228, %v1086
        %v1088 = vand.u32 %v1087, 4294901760
        %v1089 = vsub.f32 %v1087, %v1088
        %v1090 = vand.u32 %v1089, 4294901760
        %1091 = vmatpush.msra.mxu0 %v1090
        %v1092 = vand.u32 %v226, 4294901760
        %v1093 = vsub.f32 %v226, %v1092
        %v1094 = vand.u32 %v1093, 4294901760
        %v1095 = vsub.f32 %v1093, %v1094
        %v1096 = vand.u32 %v1095, 4294901760
        %1097 = vmatpush.msra.mxu0 %v1096
        %v1098 = vand.u32 %v224, 4294901760
        %v1099 = vsub.f32 %v224, %v1098
        %v1100 = vand.u32 %v1099, 4294901760
        %v1101 = vsub.f32 %v1099, %v1100
        %v1102 = vand.u32 %v1101, 4294901760
        %1103 = vmatpush.msra.mxu0 %v1102
        %v1104 = vand.u32 %v222, 4294901760
        %v1105 = vsub.f32 %v222, %v1104
        %v1106 = vand.u32 %v1105, 4294901760
        %v1107 = vsub.f32 %v1105, %v1106
        %v1108 = vand.u32 %v1107, 4294901760
        %1109 = vmatpush.msra.mxu0 %v1108
        %v1110 = vand.u32 %v287, 4294901760
        %1111 = vmatmul.f32.gmra.mxu0 %v1110
        %v1112 = vpop.f32.mrf.mxu0
        %v1113 = vadd.f32 %v1012, %v1112
        %1114 = vdwg.mxu0
        %v1115 = vand.u32 %v252, 4294901760
        %v1116 = vsub.f32 %v252, %v1115
        %1117 = vmatpush.msra.mxu0 %v1116
        %v1118 = vand.u32 %v250, 4294901760
        %v1119 = vsub.f32 %v250, %v1118
        %1120 = vmatpush.msra.mxu0 %v1119
        %v1121 = vand.u32 %v248, 4294901760
        %v1122 = vsub.f32 %v248, %v1121
        %1123 = vmatpush.msra.mxu0 %v1122
        %v1124 = vand.u32 %v246, 4294901760
        %v1125 = vsub.f32 %v246, %v1124
        %1126 = vmatpush.msra.mxu0 %v1125
        %v1127 = vand.u32 %v244, 4294901760
        %v1128 = vsub.f32 %v244, %v1127
        %1129 = vmatpush.msra.mxu0 %v1128
        %v1130 = vand.u32 %v242, 4294901760
        %v1131 = vsub.f32 %v242, %v1130
        %1132 = vmatpush.msra.mxu0 %v1131
        %v1133 = vand.u32 %v240, 4294901760
        %v1134 = vsub.f32 %v240, %v1133
        %1135 = vmatpush.msra.mxu0 %v1134
        %v1136 = vand.u32 %v238, 4294901760
        %v1137 = vsub.f32 %v238, %v1136
        %1138 = vmatpush.msra.mxu0 %v1137
        %v1139 = vand.u32 %v236, 4294901760
        %v1140 = vsub.f32 %v236, %v1139
        %1141 = vmatpush.msra.mxu0 %v1140
        %v1142 = vand.u32 %v234, 4294901760
        %v1143 = vsub.f32 %v234, %v1142
        %1144 = vmatpush.msra.mxu0 %v1143
        %v1145 = vand.u32 %v232, 4294901760
        %v1146 = vsub.f32 %v232, %v1145
        %1147 = vmatpush.msra.mxu0 %v1146
        %v1148 = vand.u32 %v230, 4294901760
        %v1149 = vsub.f32 %v230, %v1148
        %1150 = vmatpush.msra.mxu0 %v1149
        %v1151 = vand.u32 %v228, 4294901760
        %v1152 = vsub.f32 %v228, %v1151
        %1153 = vmatpush.msra.mxu0 %v1152
        %v1154 = vand.u32 %v226, 4294901760
        %v1155 = vsub.f32 %v226, %v1154
        %1156 = vmatpush.msra.mxu0 %v1155
        %v1157 = vand.u32 %v224, 4294901760
        %v1158 = vsub.f32 %v224, %v1157
        %1159 = vmatpush.msra.mxu0 %v1158
        %v1160 = vand.u32 %v222, 4294901760
        %v1161 = vsub.f32 %v222, %v1160
        %1162 = vmatpush.msra.mxu0 %v1161
        %v1163 = vand.u32 %v287, 4294901760
        %v1164 = vsub.f32 %v287, %v1163
        %1165 = vmatmul.f32.gmra.mxu0 %v1164
        %v1166 = vpop.f32.mrf.mxu0
        %v1167 = vadd.f32 %v1113, %v1166
        %1168 = vdwg.mxu0
        %v1169 = vand.u32 %v252, 4294901760
        %1170 = vmatpush.msra.mxu0 %v1169
        %v1171 = vand.u32 %v250, 4294901760
        %1172 = vmatpush.msra.mxu0 %v1171
        %v1173 = vand.u32 %v248, 4294901760
        %1174 = vmatpush.msra.mxu0 %v1173
        %v1175 = vand.u32 %v246, 4294901760
        %1176 = vmatpush.msra.mxu0 %v1175
        %v1177 = vand.u32 %v244, 4294901760
        %1178 = vmatpush.msra.mxu0 %v1177
        %v1179 = vand.u32 %v242, 4294901760
        %1180 = vmatpush.msra.mxu0 %v1179
        %v1181 = vand.u32 %v240, 4294901760
        %1182 = vmatpush.msra.mxu0 %v1181
        %v1183 = vand.u32 %v238, 4294901760
        %1184 = vmatpush.msra.mxu0 %v1183
        %v1185 = vand.u32 %v236, 4294901760
        %1186 = vmatpush.msra.mxu0 %v1185
        %v1187 = vand.u32 %v234, 4294901760
        %1188 = vmatpush.msra.mxu0 %v1187
        %v1189 = vand.u32 %v232, 4294901760
        %1190 = vmatpush.msra.mxu0 %v1189
        %v1191 = vand.u32 %v230, 4294901760
        %1192 = vmatpush.msra.mxu0 %v1191
        %v1193 = vand.u32 %v228, 4294901760
        %1194 = vmatpush.msra.mxu0 %v1193
        %v1195 = vand.u32 %v226, 4294901760
        %1196 = vmatpush.msra.mxu0 %v1195
        %v1197 = vand.u32 %v224, 4294901760
        %1198 = vmatpush.msra.mxu0 %v1197
        %v1199 = vand.u32 %v222, 4294901760
        %1200 = vmatpush.msra.mxu0 %v1199
        %v1201 = vand.u32 %v287, 4294901760
        %v1202 = vsub.f32 %v287, %v1201
        %v1203 = vand.u32 %v1202, 4294901760
        %1204 = vmatmul.f32.gmra.mxu0 %v1203
        %v1205 = vpop.f32.mrf.mxu0
        %v1206 = vadd.f32 %v1167, %v1205
        %1207 = vdwg.mxu0
        %v1208 = vand.u32 %v252, 4294901760
        %v1209 = vsub.f32 %v252, %v1208
        %v1210 = vand.u32 %v1209, 4294901760
        %1211 = vmatpush.msra.mxu0 %v1210
        %v1212 = vand.u32 %v250, 4294901760
        %v1213 = vsub.f32 %v250, %v1212
        %v1214 = vand.u32 %v1213, 4294901760
        %1215 = vmatpush.msra.mxu0 %v1214
        %v1216 = vand.u32 %v248, 4294901760
        %v1217 = vsub.f32 %v248, %v1216
        %v1218 = vand.u32 %v1217, 4294901760
        %1219 = vmatpush.msra.mxu0 %v1218
        %v1220 = vand.u32 %v246, 4294901760
        %v1221 = vsub.f32 %v246, %v1220
        %v1222 = vand.u32 %v1221, 4294901760
        %1223 = vmatpush.msra.mxu0 %v1222
        %v1224 = vand.u32 %v244, 4294901760
        %v1225 = vsub.f32 %v244, %v1224
        %v1226 = vand.u32 %v1225, 4294901760
        %1227 = vmatpush.msra.mxu0 %v1226
        %v1228 = vand.u32 %v242, 4294901760
        %v1229 = vsub.f32 %v242, %v1228
        %v1230 = vand.u32 %v1229, 4294901760
        %1231 = vmatpush.msra.mxu0 %v1230
        %v1232 = vand.u32 %v240, 4294901760
        %v1233 = vsub.f32 %v240, %v1232
        %v1234 = vand.u32 %v1233, 4294901760
        %1235 = vmatpush.msra.mxu0 %v1234
        %v1236 = vand.u32 %v238, 4294901760
        %v1237 = vsub.f32 %v238, %v1236
        %v1238 = vand.u32 %v1237, 4294901760
        %1239 = vmatpush.msra.mxu0 %v1238
        %v1240 = vand.u32 %v236, 4294901760
        %v1241 = vsub.f32 %v236, %v1240
        %v1242 = vand.u32 %v1241, 4294901760
        %1243 = vmatpush.msra.mxu0 %v1242
        %v1244 = vand.u32 %v234, 4294901760
        %v1245 = vsub.f32 %v234, %v1244
        %v1246 = vand.u32 %v1245, 4294901760
        %1247 = vmatpush.msra.mxu0 %v1246
        %v1248 = vand.u32 %v232, 4294901760
        %v1249 = vsub.f32 %v232, %v1248
        %v1250 = vand.u32 %v1249, 4294901760
        %1251 = vmatpush.msra.mxu0 %v1250
        %v1252 = vand.u32 %v230, 4294901760
        %v1253 = vsub.f32 %v230, %v1252
        %v1254 = vand.u32 %v1253, 4294901760
        %1255 = vmatpush.msra.mxu0 %v1254
        %v1256 = vand.u32 %v228, 4294901760
        %v1257 = vsub.f32 %v228, %v1256
        %v1258 = vand.u32 %v1257, 4294901760
        %1259 = vmatpush.msra.mxu0 %v1258
        %v1260 = vand.u32 %v226, 4294901760
        %v1261 = vsub.f32 %v226, %v1260
        %v1262 = vand.u32 %v1261, 4294901760
        %1263 = vmatpush.msra.mxu0 %v1262
        %v1264 = vand.u32 %v224, 4294901760
        %v1265 = vsub.f32 %v224, %v1264
        %v1266 = vand.u32 %v1265, 4294901760
        %1267 = vmatpush.msra.mxu0 %v1266
        %v1268 = vand.u32 %v222, 4294901760
        %v1269 = vsub.f32 %v222, %v1268
        %v1270 = vand.u32 %v1269, 4294901760
        %1271 = vmatpush.msra.mxu0 %v1270
        %v1272 = vand.u32 %v287, 4294901760
        %1273 = vmatmul.f32.gmra.mxu0 %v1272
        %v1274 = vpop.f32.mrf.mxu0
        %v1275 = vadd.f32 %v1206, %v1274
        %1276 = vdwg.mxu0
        %v1277 = vand.u32 %v252, 4294901760
        %1278 = vmatpush.msra.mxu0 %v1277
        %v1279 = vand.u32 %v250, 4294901760
        %1280 = vmatpush.msra.mxu0 %v1279
        %v1281 = vand.u32 %v248, 4294901760
        %1282 = vmatpush.msra.mxu0 %v1281
        %v1283 = vand.u32 %v246, 4294901760
        %1284 = vmatpush.msra.mxu0 %v1283
        %v1285 = vand.u32 %v244, 4294901760
        %1286 = vmatpush.msra.mxu0 %v1285
        %v1287 = vand.u32 %v242, 4294901760
        %1288 = vmatpush.msra.mxu0 %v1287
        %v1289 = vand.u32 %v240, 4294901760
        %1290 = vmatpush.msra.mxu0 %v1289
        %v1291 = vand.u32 %v238, 4294901760
        %1292 = vmatpush.msra.mxu0 %v1291
        %v1293 = vand.u32 %v236, 4294901760
        %1294 = vmatpush.msra.mxu0 %v1293
        %v1295 = vand.u32 %v234, 4294901760
        %1296 = vmatpush.msra.mxu0 %v1295
        %v1297 = vand.u32 %v232, 4294901760
        %1298 = vmatpush.msra.mxu0 %v1297
        %v1299 = vand.u32 %v230, 4294901760
        %1300 = vmatpush.msra.mxu0 %v1299
        %v1301 = vand.u32 %v228, 4294901760
        %1302 = vmatpush.msra.mxu0 %v1301
        %v1303 = vand.u32 %v226, 4294901760
        %1304 = vmatpush.msra.mxu0 %v1303
        %v1305 = vand.u32 %v224, 4294901760
        %1306 = vmatpush.msra.mxu0 %v1305
        %v1307 = vand.u32 %v222, 4294901760
        %1308 = vmatpush.msra.mxu0 %v1307
        %v1309 = vand.u32 %v287, 4294901760
        %1310 = vmatmul.f32.gmra.mxu0 %v1309
        %v1311 = vpop.f32.mrf.mxu0
        %v1312 = vadd.f32 %v1275, %v1311
        %1313 = vdwg.mxu0
        %v1314 = vand.u32 %v284, 4294901760
        %1315 = vmatpush.msra.mxu0 %v1314
        %v1316 = vand.u32 %v282, 4294901760
        %1317 = vmatpush.msra.mxu0 %v1316
        %v1318 = vand.u32 %v280, 4294901760
        %1319 = vmatpush.msra.mxu0 %v1318
        %v1320 = vand.u32 %v278, 4294901760
        %1321 = vmatpush.msra.mxu0 %v1320
        %v1322 = vand.u32 %v276, 4294901760
        %1323 = vmatpush.msra.mxu0 %v1322
        %v1324 = vand.u32 %v274, 4294901760
        %1325 = vmatpush.msra.mxu0 %v1324
        %v1326 = vand.u32 %v272, 4294901760
        %1327 = vmatpush.msra.mxu0 %v1326
        %v1328 = vand.u32 %v270, 4294901760
        %1329 = vmatpush.msra.mxu0 %v1328
        %v1330 = vand.u32 %v268, 4294901760
        %1331 = vmatpush.msra.mxu0 %v1330
        %v1332 = vand.u32 %v266, 4294901760
        %1333 = vmatpush.msra.mxu0 %v1332
        %v1334 = vand.u32 %v264, 4294901760
        %1335 = vmatpush.msra.mxu0 %v1334
        %v1336 = vand.u32 %v262, 4294901760
        %1337 = vmatpush.msra.mxu0 %v1336
        %v1338 = vand.u32 %v260, 4294901760
        %1339 = vmatpush.msra.mxu0 %v1338
        %v1340 = vand.u32 %v258, 4294901760
        %1341 = vmatpush.msra.mxu0 %v1340
        %v1342 = vand.u32 %v256, 4294901760
        %1343 = vmatpush.msra.mxu0 %v1342
        %v1344 = vand.u32 %v254, 4294901760
        %1345 = vmatpush.msra.mxu0 %v1344
        %v1346 = vand.u32 %v288, 4294901760
        %v1347 = vsub.f32 %v288, %v1346
        %v1348 = vand.u32 %v1347, 4294901760
        %v1349 = vsub.f32 %v1347, %v1348
        %v1350 = vand.u32 %v1349, 4294901760
        %1351 = vmatmul.f32.gmra.mxu0 %v1350
        %v1352 = vpop.f32.mrf.mxu0
        %v1353 = vadd.f32 %v1312, %v1352
        %1354 = vdwg.mxu0
        %v1355 = vand.u32 %v284, 4294901760
        %v1356 = vsub.f32 %v284, %v1355
        %v1357 = vand.u32 %v1356, 4294901760
        %v1358 = vsub.f32 %v1356, %v1357
        %v1359 = vand.u32 %v1358, 4294901760
        %1360 = vmatpush.msra.mxu0 %v1359
        %v1361 = vand.u32 %v282, 4294901760
        %v1362 = vsub.f32 %v282, %v1361
        %v1363 = vand.u32 %v1362, 4294901760
        %v1364 = vsub.f32 %v1362, %v1363
        %v1365 = vand.u32 %v1364, 4294901760
        %1366 = vmatpush.msra.mxu0 %v1365
        %v1367 = vand.u32 %v280, 4294901760
        %v1368 = vsub.f32 %v280, %v1367
        %v1369 = vand.u32 %v1368, 4294901760
        %v1370 = vsub.f32 %v1368, %v1369
        %v1371 = vand.u32 %v1370, 4294901760
        %1372 = vmatpush.msra.mxu0 %v1371
        %v1373 = vand.u32 %v278, 4294901760
        %v1374 = vsub.f32 %v278, %v1373
        %v1375 = vand.u32 %v1374, 4294901760
        %v1376 = vsub.f32 %v1374, %v1375
        %v1377 = vand.u32 %v1376, 4294901760
        %1378 = vmatpush.msra.mxu0 %v1377
        %v1379 = vand.u32 %v276, 4294901760
        %v1380 = vsub.f32 %v276, %v1379
        %v1381 = vand.u32 %v1380, 4294901760
        %v1382 = vsub.f32 %v1380, %v1381
        %v1383 = vand.u32 %v1382, 4294901760
        %1384 = vmatpush.msra.mxu0 %v1383
        %v1385 = vand.u32 %v274, 4294901760
        %v1386 = vsub.f32 %v274, %v1385
        %v1387 = vand.u32 %v1386, 4294901760
        %v1388 = vsub.f32 %v1386, %v1387
        %v1389 = vand.u32 %v1388, 4294901760
        %1390 = vmatpush.msra.mxu0 %v1389
        %v1391 = vand.u32 %v272, 4294901760
        %v1392 = vsub.f32 %v272, %v1391
        %v1393 = vand.u32 %v1392, 4294901760
        %v1394 = vsub.f32 %v1392, %v1393
        %v1395 = vand.u32 %v1394, 4294901760
        %1396 = vmatpush.msra.mxu0 %v1395
        %v1397 = vand.u32 %v270, 4294901760
        %v1398 = vsub.f32 %v270, %v1397
        %v1399 = vand.u32 %v1398, 4294901760
        %v1400 = vsub.f32 %v1398, %v1399
        %v1401 = vand.u32 %v1400, 4294901760
        %1402 = vmatpush.msra.mxu0 %v1401
        %v1403 = vand.u32 %v268, 4294901760
        %v1404 = vsub.f32 %v268, %v1403
        %v1405 = vand.u32 %v1404, 4294901760
        %v1406 = vsub.f32 %v1404, %v1405
        %v1407 = vand.u32 %v1406, 4294901760
        %1408 = vmatpush.msra.mxu0 %v1407
        %v1409 = vand.u32 %v266, 4294901760
        %v1410 = vsub.f32 %v266, %v1409
        %v1411 = vand.u32 %v1410, 4294901760
        %v1412 = vsub.f32 %v1410, %v1411
        %v1413 = vand.u32 %v1412, 4294901760
        %1414 = vmatpush.msra.mxu0 %v1413
        %v1415 = vand.u32 %v264, 4294901760
        %v1416 = vsub.f32 %v264, %v1415
        %v1417 = vand.u32 %v1416, 4294901760
        %v1418 = vsub.f32 %v1416, %v1417
        %v1419 = vand.u32 %v1418, 4294901760
        %1420 = vmatpush.msra.mxu0 %v1419
        %v1421 = vand.u32 %v262, 4294901760
        %v1422 = vsub.f32 %v262, %v1421
        %v1423 = vand.u32 %v1422, 4294901760
        %v1424 = vsub.f32 %v1422, %v1423
        %v1425 = vand.u32 %v1424, 4294901760
        %1426 = vmatpush.msra.mxu0 %v1425
        %v1427 = vand.u32 %v260, 4294901760
        %v1428 = vsub.f32 %v260, %v1427
        %v1429 = vand.u32 %v1428, 4294901760
        %v1430 = vsub.f32 %v1428, %v1429
        %v1431 = vand.u32 %v1430, 4294901760
        %1432 = vmatpush.msra.mxu0 %v1431
        %v1433 = vand.u32 %v258, 4294901760
        %v1434 = vsub.f32 %v258, %v1433
        %v1435 = vand.u32 %v1434, 4294901760
        %v1436 = vsub.f32 %v1434, %v1435
        %v1437 = vand.u32 %v1436, 4294901760
        %1438 = vmatpush.msra.mxu0 %v1437
        %v1439 = vand.u32 %v256, 4294901760
        %v1440 = vsub.f32 %v256, %v1439
        %v1441 = vand.u32 %v1440, 4294901760
        %v1442 = vsub.f32 %v1440, %v1441
        %v1443 = vand.u32 %v1442, 4294901760
        %1444 = vmatpush.msra.mxu0 %v1443
        %v1445 = vand.u32 %v254, 4294901760
        %v1446 = vsub.f32 %v254, %v1445
        %v1447 = vand.u32 %v1446, 4294901760
        %v1448 = vsub.f32 %v1446, %v1447
        %v1449 = vand.u32 %v1448, 4294901760
        %1450 = vmatpush.msra.mxu0 %v1449
        %v1451 = vand.u32 %v288, 4294901760
        %1452 = vmatmul.f32.gmra.mxu0 %v1451
        %v1453 = vpop.f32.mrf.mxu0
        %v1454 = vadd.f32 %v1353, %v1453
        %1455 = vdwg.mxu0
        %v1456 = vand.u32 %v284, 4294901760
        %v1457 = vsub.f32 %v284, %v1456
        %1458 = vmatpush.msra.mxu0 %v1457
        %v1459 = vand.u32 %v282, 4294901760
        %v1460 = vsub.f32 %v282, %v1459
        %1461 = vmatpush.msra.mxu0 %v1460
        %v1462 = vand.u32 %v280, 4294901760
        %v1463 = vsub.f32 %v280, %v1462
        %1464 = vmatpush.msra.mxu0 %v1463
        %v1465 = vand.u32 %v278, 4294901760
        %v1466 = vsub.f32 %v278, %v1465
        %1467 = vmatpush.msra.mxu0 %v1466
        %v1468 = vand.u32 %v276, 4294901760
        %v1469 = vsub.f32 %v276, %v1468
        %1470 = vmatpush.msra.mxu0 %v1469
        %v1471 = vand.u32 %v274, 4294901760
        %v1472 = vsub.f32 %v274, %v1471
        %1473 = vmatpush.msra.mxu0 %v1472
        %v1474 = vand.u32 %v272, 4294901760
        %v1475 = vsub.f32 %v272, %v1474
        %1476 = vmatpush.msra.mxu0 %v1475
        %v1477 = vand.u32 %v270, 4294901760
        %v1478 = vsub.f32 %v270, %v1477
        %1479 = vmatpush.msra.mxu0 %v1478
        %v1480 = vand.u32 %v268, 4294901760
        %v1481 = vsub.f32 %v268, %v1480
        %1482 = vmatpush.msra.mxu0 %v1481
        %v1483 = vand.u32 %v266, 4294901760
        %v1484 = vsub.f32 %v266, %v1483
        %1485 = vmatpush.msra.mxu0 %v1484
        %v1486 = vand.u32 %v264, 4294901760
        %v1487 = vsub.f32 %v264, %v1486
        %1488 = vmatpush.msra.mxu0 %v1487
        %v1489 = vand.u32 %v262, 4294901760
        %v1490 = vsub.f32 %v262, %v1489
        %1491 = vmatpush.msra.mxu0 %v1490
        %v1492 = vand.u32 %v260, 4294901760
        %v1493 = vsub.f32 %v260, %v1492
        %1494 = vmatpush.msra.mxu0 %v1493
        %v1495 = vand.u32 %v258, 4294901760
        %v1496 = vsub.f32 %v258, %v1495
        %1497 = vmatpush.msra.mxu0 %v1496
        %v1498 = vand.u32 %v256, 4294901760
        %v1499 = vsub.f32 %v256, %v1498
        %1500 = vmatpush.msra.mxu0 %v1499
        %v1501 = vand.u32 %v254, 4294901760
        %v1502 = vsub.f32 %v254, %v1501
        %1503 = vmatpush.msra.mxu0 %v1502
        %v1504 = vand.u32 %v288, 4294901760
        %v1505 = vsub.f32 %v288, %v1504
        %1506 = vmatmul.f32.gmra.mxu0 %v1505
        %v1507 = vpop.f32.mrf.mxu0
        %v1508 = vadd.f32 %v1454, %v1507
        %1509 = vdwg.mxu0
        %v1510 = vand.u32 %v284, 4294901760
        %1511 = vmatpush.msra.mxu0 %v1510
        %v1512 = vand.u32 %v282, 4294901760
        %1513 = vmatpush.msra.mxu0 %v1512
        %v1514 = vand.u32 %v280, 4294901760
        %1515 = vmatpush.msra.mxu0 %v1514
        %v1516 = vand.u32 %v278, 4294901760
        %1517 = vmatpush.msra.mxu0 %v1516
        %v1518 = vand.u32 %v276, 4294901760
        %1519 = vmatpush.msra.mxu0 %v1518
        %v1520 = vand.u32 %v274, 4294901760
        %1521 = vmatpush.msra.mxu0 %v1520
        %v1522 = vand.u32 %v272, 4294901760
        %1523 = vmatpush.msra.mxu0 %v1522
        %v1524 = vand.u32 %v270, 4294901760
        %1525 = vmatpush.msra.mxu0 %v1524
        %v1526 = vand.u32 %v268, 4294901760
        %1527 = vmatpush.msra.mxu0 %v1526
        %v1528 = vand.u32 %v266, 4294901760
        %1529 = vmatpush.msra.mxu0 %v1528
        %v1530 = vand.u32 %v264, 4294901760
        %1531 = vmatpush.msra.mxu0 %v1530
        %v1532 = vand.u32 %v262, 4294901760
        %1533 = vmatpush.msra.mxu0 %v1532
        %v1534 = vand.u32 %v260, 4294901760
        %1535 = vmatpush.msra.mxu0 %v1534
        %v1536 = vand.u32 %v258, 4294901760
        %1537 = vmatpush.msra.mxu0 %v1536
        %v1538 = vand.u32 %v256, 4294901760
        %1539 = vmatpush.msra.mxu0 %v1538
        %v1540 = vand.u32 %v254, 4294901760
        %1541 = vmatpush.msra.mxu0 %v1540
        %v1542 = vand.u32 %v288, 4294901760
        %v1543 = vsub.f32 %v288, %v1542
        %v1544 = vand.u32 %v1543, 4294901760
        %1545 = vmatmul.f32.gmra.mxu0 %v1544
        %v1546 = vpop.f32.mrf.mxu0
        %v1547 = vadd.f32 %v1508, %v1546
        %1548 = vdwg.mxu0
        %v1549 = vand.u32 %v284, 4294901760
        %v1550 = vsub.f32 %v284, %v1549
        %v1551 = vand.u32 %v1550, 4294901760
        %1552 = vmatpush.msra.mxu0 %v1551
        %v1553 = vand.u32 %v282, 4294901760
        %v1554 = vsub.f32 %v282, %v1553
        %v1555 = vand.u32 %v1554, 4294901760
        %1556 = vmatpush.msra.mxu0 %v1555
        %v1557 = vand.u32 %v280, 4294901760
        %v1558 = vsub.f32 %v280, %v1557
        %v1559 = vand.u32 %v1558, 4294901760
        %1560 = vmatpush.msra.mxu0 %v1559
        %v1561 = vand.u32 %v278, 4294901760
        %v1562 = vsub.f32 %v278, %v1561
        %v1563 = vand.u32 %v1562, 4294901760
        %1564 = vmatpush.msra.mxu0 %v1563
        %v1565 = vand.u32 %v276, 4294901760
        %v1566 = vsub.f32 %v276, %v1565
        %v1567 = vand.u32 %v1566, 4294901760
        %1568 = vmatpush.msra.mxu0 %v1567
        %v1569 = vand.u32 %v274, 4294901760
        %v1570 = vsub.f32 %v274, %v1569
        %v1571 = vand.u32 %v1570, 4294901760
        %1572 = vmatpush.msra.mxu0 %v1571
        %v1573 = vand.u32 %v272, 4294901760
        %v1574 = vsub.f32 %v272, %v1573
        %v1575 = vand.u32 %v1574, 4294901760
        %1576 = vmatpush.msra.mxu0 %v1575
        %v1577 = vand.u32 %v270, 4294901760
        %v1578 = vsub.f32 %v270, %v1577
        %v1579 = vand.u32 %v1578, 4294901760
        %1580 = vmatpush.msra.mxu0 %v1579
        %v1581 = vand.u32 %v268, 4294901760
        %v1582 = vsub.f32 %v268, %v1581
        %v1583 = vand.u32 %v1582, 4294901760
        %1584 = vmatpush.msra.mxu0 %v1583
        %v1585 = vand.u32 %v266, 4294901760
        %v1586 = vsub.f32 %v266, %v1585
        %v1587 = vand.u32 %v1586, 4294901760
        %1588 = vmatpush.msra.mxu0 %v1587
        %v1589 = vand.u32 %v264, 4294901760
        %v1590 = vsub.f32 %v264, %v1589
        %v1591 = vand.u32 %v1590, 4294901760
        %1592 = vmatpush.msra.mxu0 %v1591
        %v1593 = vand.u32 %v262, 4294901760
        %v1594 = vsub.f32 %v262, %v1593
        %v1595 = vand.u32 %v1594, 4294901760
        %1596 = vmatpush.msra.mxu0 %v1595
        %v1597 = vand.u32 %v260, 4294901760
        %v1598 = vsub.f32 %v260, %v1597
        %v1599 = vand.u32 %v1598, 4294901760
        %1600 = vmatpush.msra.mxu0 %v1599
        %v1601 = vand.u32 %v258, 4294901760
        %v1602 = vsub.f32 %v258, %v1601
        %v1603 = vand.u32 %v1602, 4294901760
        %1604 = vmatpush.msra.mxu0 %v1603
        %v1605 = vand.u32 %v256, 4294901760
        %v1606 = vsub.f32 %v256, %v1605
        %v1607 = vand.u32 %v1606, 4294901760
        %1608 = vmatpush.msra.mxu0 %v1607
        %v1609 = vand.u32 %v254, 4294901760
        %v1610 = vsub.f32 %v254, %v1609
        %v1611 = vand.u32 %v1610, 4294901760
        %1612 = vmatpush.msra.mxu0 %v1611
        %v1613 = vand.u32 %v288, 4294901760
        %1614 = vmatmul.f32.gmra.mxu0 %v1613
        %v1615 = vpop.f32.mrf.mxu0
        %v1616 = vadd.f32 %v1547, %v1615
        %1617 = vdwg.mxu0
        %v1618 = vand.u32 %v284, 4294901760
        %1619 = vmatpush.msra.mxu0 %v1618
        %v1620 = vand.u32 %v282, 4294901760
        %1621 = vmatpush.msra.mxu0 %v1620
        %v1622 = vand.u32 %v280, 4294901760
        %1623 = vmatpush.msra.mxu0 %v1622
        %v1624 = vand.u32 %v278, 4294901760
        %1625 = vmatpush.msra.mxu0 %v1624
        %v1626 = vand.u32 %v276, 4294901760
        %1627 = vmatpush.msra.mxu0 %v1626
        %v1628 = vand.u32 %v274, 4294901760
        %1629 = vmatpush.msra.mxu0 %v1628
        %v1630 = vand.u32 %v272, 4294901760
        %1631 = vmatpush.msra.mxu0 %v1630
        %v1632 = vand.u32 %v270, 4294901760
        %1633 = vmatpush.msra.mxu0 %v1632
        %v1634 = vand.u32 %v268, 4294901760
        %1635 = vmatpush.msra.mxu0 %v1634
        %v1636 = vand.u32 %v266, 4294901760
        %1637 = vmatpush.msra.mxu0 %v1636
        %v1638 = vand.u32 %v264, 4294901760
        %1639 = vmatpush.msra.mxu0 %v1638
        %v1640 = vand.u32 %v262, 4294901760
        %1641 = vmatpush.msra.mxu0 %v1640
        %v1642 = vand.u32 %v260, 4294901760
        %1643 = vmatpush.msra.mxu0 %v1642
        %v1644 = vand.u32 %v258, 4294901760
        %1645 = vmatpush.msra.mxu0 %v1644
        %v1646 = vand.u32 %v256, 4294901760
        %1647 = vmatpush.msra.mxu0 %v1646
        %v1648 = vand.u32 %v254, 4294901760
        %1649 = vmatpush.msra.mxu0 %v1648
        %v1650 = vand.u32 %v288, 4294901760
        %1651 = vmatmul.f32.gmra.mxu0 %v1650
        %v1652 = vpop.f32.mrf.mxu0
        %v1653 = vadd.f32 %v1616, %v1652
        %1654 = vdwg.mxu0
        %v1655 = vld [vmem:[#allocation7] sm:$0xf]
        %vm1656 = vcmask 31744
        %v1658 = vsel %vm1656, %v1655, 0
        %vm1660 = vcmask 1043456
        %v1662 = vsel %vm1660, %v971, 0
        %v1665 = vsel %vm1660, %v1653, 0
        %1667 = vmatpush.msra.mxu0 0.0
        %1668 = vmatpush.msra.mxu0 0.0
        %1669 = vmatpush.msra.mxu0 0.0
        %1670 = vmatpush.msra.mxu0 0.0
        %1671 = vmatpush.msra.mxu0 0.0
        %1672 = vmatpush.msra.mxu0 0.0
        %1673 = vmatpush.msra.mxu0 0.0
        %1674 = vmatpush.msra.mxu0 0.0
        %1675 = vmatpush.msra.mxu0 0.0
        %1676 = vmatpush.msra.mxu0 0.0
        %1677 = vmatpush.msra.mxu0 0.0
        %1678 = vmatpush.msra.mxu0 0.0
        %1679 = vmatpush.msra.mxu0 0.0
        %1680 = vmatpush.msra.mxu0 0.0
        %1681 = vmatpush.msra.mxu0 0.0
        %v1682 = vand.u32 %v1662, 4294901760
        %1683 = vmatpush.msra.mxu0 %v1682
        %v1684 = vand.u32 %v1658, 4294901760
        %v1685 = vsub.f32 %v1658, %v1684
        %v1686 = vand.u32 %v1685, 4294901760
        %v1687 = vsub.f32 %v1685, %v1686
        %v1688 = vand.u32 %v1687, 4294901760
        %1689 = vmatmul.f32.gmra.mxu0 %v1688
        %v1690 = vpop.f32.mrf.mxu0
        %v1691 = vadd.f32 0.0, %v1690
        %1692 = vdwg.mxu0
        %1693 = vmatpush.msra.mxu0 0.0
        %1694 = vmatpush.msra.mxu0 0.0
        %1695 = vmatpush.msra.mxu0 0.0
        %1696 = vmatpush.msra.mxu0 0.0
        %1697 = vmatpush.msra.mxu0 0.0
        %1698 = vmatpush.msra.mxu0 0.0
        %1699 = vmatpush.msra.mxu0 0.0
        %1700 = vmatpush.msra.mxu0 0.0
        %1701 = vmatpush.msra.mxu0 0.0
        %1702 = vmatpush.msra.mxu0 0.0
        %1703 = vmatpush.msra.mxu0 0.0
        %1704 = vmatpush.msra.mxu0 0.0
        %1705 = vmatpush.msra.mxu0 0.0
        %1706 = vmatpush.msra.mxu0 0.0
        %1707 = vmatpush.msra.mxu0 0.0
        %v1708 = vand.u32 %v1662, 4294901760
        %v1709 = vsub.f32 %v1662, %v1708
        %v1710 = vand.u32 %v1709, 4294901760
        %v1711 = vsub.f32 %v1709, %v1710
        %v1712 = vand.u32 %v1711, 4294901760
        %1713 = vmatpush.msra.mxu0 %v1712
        %v1714 = vand.u32 %v1658, 4294901760
        %1715 = vmatmul.f32.gmra.mxu0 %v1714
        %v1716 = vpop.f32.mrf.mxu0
        %v1717 = vadd.f32 %v1691, %v1716
        %1718 = vdwg.mxu0
        %1719 = vmatpush.msra.mxu0 0.0
        %1720 = vmatpush.msra.mxu0 0.0
        %1721 = vmatpush.msra.mxu0 0.0
        %1722 = vmatpush.msra.mxu0 0.0
        %1723 = vmatpush.msra.mxu0 0.0
        %1724 = vmatpush.msra.mxu0 0.0
        %1725 = vmatpush.msra.mxu0 0.0
        %1726 = vmatpush.msra.mxu0 0.0
        %1727 = vmatpush.msra.mxu0 0.0
        %1728 = vmatpush.msra.mxu0 0.0
        %1729 = vmatpush.msra.mxu0 0.0
        %1730 = vmatpush.msra.mxu0 0.0
        %1731 = vmatpush.msra.mxu0 0.0
        %1732 = vmatpush.msra.mxu0 0.0
        %1733 = vmatpush.msra.mxu0 0.0
        %v1734 = vand.u32 %v1662, 4294901760
        %v1735 = vsub.f32 %v1662, %v1734
        %1736 = vmatpush.msra.mxu0 %v1735
        %v1737 = vand.u32 %v1658, 4294901760
        %v1738 = vsub.f32 %v1658, %v1737
        %1739 = vmatmul.f32.gmra.mxu0 %v1738
        %v1740 = vpop.f32.mrf.mxu0
        %v1741 = vadd.f32 %v1717, %v1740
        %1742 = vdwg.mxu0
        %1743 = vmatpush.msra.mxu0 0.0
        %1744 = vmatpush.msra.mxu0 0.0
        %1745 = vmatpush.msra.mxu0 0.0
        %1746 = vmatpush.msra.mxu0 0.0
        %1747 = vmatpush.msra.mxu0 0.0
        %1748 = vmatpush.msra.mxu0 0.0
        %1749 = vmatpush.msra.mxu0 0.0
        %1750 = vmatpush.msra.mxu0 0.0
        %1751 = vmatpush.msra.mxu0 0.0
        %1752 = vmatpush.msra.mxu0 0.0
        %1753 = vmatpush.msra.mxu0 0.0
        %1754 = vmatpush.msra.mxu0 0.0
        %1755 = vmatpush.msra.mxu0 0.0
        %1756 = vmatpush.msra.mxu0 0.0
        %1757 = vmatpush.msra.mxu0 0.0
        %v1758 = vand.u32 %v1662, 4294901760
        %1759 = vmatpush.msra.mxu0 %v1758
        %v1760 = vand.u32 %v1658, 4294901760
        %v1761 = vsub.f32 %v1658, %v1760
        %v1762 = vand.u32 %v1761, 4294901760
        %1763 = vmatmul.f32.gmra.mxu0 %v1762
        %v1764 = vpop.f32.mrf.mxu0
        %v1765 = vadd.f32 %v1741, %v1764
        %1766 = vdwg.mxu0
        %1767 = vmatpush.msra.mxu0 0.0
        %1768 = vmatpush.msra.mxu0 0.0
        %1769 = vmatpush.msra.mxu0 0.0
        %1770 = vmatpush.msra.mxu0 0.0
        %1771 = vmatpush.msra.mxu0 0.0
        %1772 = vmatpush.msra.mxu0 0.0
        %1773 = vmatpush.msra.mxu0 0.0
        %1774 = vmatpush.msra.mxu0 0.0
        %1775 = vmatpush.msra.mxu0 0.0
        %1776 = vmatpush.msra.mxu0 0.0
        %1777 = vmatpush.msra.mxu0 0.0
        %1778 = vmatpush.msra.mxu0 0.0
        %1779 = vmatpush.msra.mxu0 0.0
        %1780 = vmatpush.msra.mxu0 0.0
        %1781 = vmatpush.msra.mxu0 0.0
        %v1782 = vand.u32 %v1662, 4294901760
        %v1783 = vsub.f32 %v1662, %v1782
        %v1784 = vand.u32 %v1783, 4294901760
        %1785 = vmatpush.msra.mxu0 %v1784
        %v1786 = vand.u32 %v1658, 4294901760
        %1787 = vmatmul.f32.gmra.mxu0 %v1786
        %v1788 = vpop.f32.mrf.mxu0
        %v1789 = vadd.f32 %v1765, %v1788
        %1790 = vdwg.mxu0
        %1791 = vmatpush.msra.mxu0 0.0
        %1792 = vmatpush.msra.mxu0 0.0
        %1793 = vmatpush.msra.mxu0 0.0
        %1794 = vmatpush.msra.mxu0 0.0
        %1795 = vmatpush.msra.mxu0 0.0
        %1796 = vmatpush.msra.mxu0 0.0
        %1797 = vmatpush.msra.mxu0 0.0
        %1798 = vmatpush.msra.mxu0 0.0
        %1799 = vmatpush.msra.mxu0 0.0
        %1800 = vmatpush.msra.mxu0 0.0
        %1801 = vmatpush.msra.mxu0 0.0
        %1802 = vmatpush.msra.mxu0 0.0
        %1803 = vmatpush.msra.mxu0 0.0
        %1804 = vmatpush.msra.mxu0 0.0
        %1805 = vmatpush.msra.mxu0 0.0
        %v1806 = vand.u32 %v1662, 4294901760
        %1807 = vmatpush.msra.mxu0 %v1806
        %v1808 = vand.u32 %v1658, 4294901760
        %1809 = vmatmul.f32.gmra.mxu0 %v1808
        %v1810 = vpop.f32.mrf.mxu0
        %v1811 = vadd.f32 %v1789, %v1810
        %1812 = vdwg.mxu0
        %1813 = vmatpush.msra.mxu0 0.0
        %1814 = vmatpush.msra.mxu0 0.0
        %1815 = vmatpush.msra.mxu0 0.0
        %1816 = vmatpush.msra.mxu0 0.0
        %1817 = vmatpush.msra.mxu0 0.0
        %1818 = vmatpush.msra.mxu0 0.0
        %1819 = vmatpush.msra.mxu0 0.0
        %1820 = vmatpush.msra.mxu0 0.0
        %1821 = vmatpush.msra.mxu0 0.0
        %1822 = vmatpush.msra.mxu0 0.0
        %1823 = vmatpush.msra.mxu0 0.0
        %1824 = vmatpush.msra.mxu0 0.0
        %1825 = vmatpush.msra.mxu0 0.0
        %1826 = vmatpush.msra.mxu0 0.0
        %1827 = vmatpush.msra.mxu0 0.0
        %v1828 = vand.u32 %v1665, 4294901760
        %1829 = vmatpush.msra.mxu0 %v1828
        %v1830 = vand.u32 %v1658, 4294901760
        %v1831 = vsub.f32 %v1658, %v1830
        %v1832 = vand.u32 %v1831, 4294901760
        %v1833 = vsub.f32 %v1831, %v1832
        %v1834 = vand.u32 %v1833, 4294901760
        %1835 = vmatmul.f32.gmra.mxu0 %v1834
        %v1836 = vpop.f32.mrf.mxu0
        %v1837 = vadd.f32 0.0, %v1836
        %1838 = vdwg.mxu0
        %1839 = vmatpush.msra.mxu0 0.0
        %1840 = vmatpush.msra.mxu0 0.0
        %1841 = vmatpush.msra.mxu0 0.0
        %1842 = vmatpush.msra.mxu0 0.0
        %1843 = vmatpush.msra.mxu0 0.0
        %1844 = vmatpush.msra.mxu0 0.0
        %1845 = vmatpush.msra.mxu0 0.0
        %1846 = vmatpush.msra.mxu0 0.0
        %1847 = vmatpush.msra.mxu0 0.0
        %1848 = vmatpush.msra.mxu0 0.0
        %1849 = vmatpush.msra.mxu0 0.0
        %1850 = vmatpush.msra.mxu0 0.0
        %1851 = vmatpush.msra.mxu0 0.0
        %1852 = vmatpush.msra.mxu0 0.0
        %1853 = vmatpush.msra.mxu0 0.0
        %v1854 = vand.u32 %v1665, 4294901760
        %v1855 = vsub.f32 %v1665, %v1854
        %v1856 = vand.u32 %v1855, 4294901760
        %v1857 = vsub.f32 %v1855, %v1856
        %v1858 = vand.u32 %v1857, 4294901760
        %1859 = vmatpush.msra.mxu0 %v1858
        %v1860 = vand.u32 %v1658, 4294901760
        %1861 = vmatmul.f32.gmra.mxu0 %v1860
        %v1862 = vpop.f32.mrf.mxu0
        %v1863 = vadd.f32 %v1837, %v1862
        %1864 = vdwg.mxu0
        %1865 = vmatpush.msra.mxu0 0.0
        %1866 = vmatpush.msra.mxu0 0.0
        %1867 = vmatpush.msra.mxu0 0.0
        %1868 = vmatpush.msra.mxu0 0.0
        %1869 = vmatpush.msra.mxu0 0.0
        %1870 = vmatpush.msra.mxu0 0.0
        %1871 = vmatpush.msra.mxu0 0.0
        %1872 = vmatpush.msra.mxu0 0.0
        %1873 = vmatpush.msra.mxu0 0.0
        %1874 = vmatpush.msra.mxu0 0.0
        %1875 = vmatpush.msra.mxu0 0.0
        %1876 = vmatpush.msra.mxu0 0.0
        %1877 = vmatpush.msra.mxu0 0.0
        %1878 = vmatpush.msra.mxu0 0.0
        %1879 = vmatpush.msra.mxu0 0.0
        %v1880 = vand.u32 %v1665, 4294901760
        %v1881 = vsub.f32 %v1665, %v1880
        %1882 = vmatpush.msra.mxu0 %v1881
        %v1883 = vand.u32 %v1658, 4294901760
        %v1884 = vsub.f32 %v1658, %v1883
        %1885 = vmatmul.f32.gmra.mxu0 %v1884
        %v1886 = vpop.f32.mrf.mxu0
        %v1887 = vadd.f32 %v1863, %v1886
        %1888 = vdwg.mxu0
        %1889 = vmatpush.msra.mxu0 0.0
        %1890 = vmatpush.msra.mxu0 0.0
        %1891 = vmatpush.msra.mxu0 0.0
        %1892 = vmatpush.msra.mxu0 0.0
        %1893 = vmatpush.msra.mxu0 0.0
        %1894 = vmatpush.msra.mxu0 0.0
        %1895 = vmatpush.msra.mxu0 0.0
        %1896 = vmatpush.msra.mxu0 0.0
        %1897 = vmatpush.msra.mxu0 0.0
        %1898 = vmatpush.msra.mxu0 0.0
        %1899 = vmatpush.msra.mxu0 0.0
        %1900 = vmatpush.msra.mxu0 0.0
        %1901 = vmatpush.msra.mxu0 0.0
        %1902 = vmatpush.msra.mxu0 0.0
        %1903 = vmatpush.msra.mxu0 0.0
        %v1904 = vand.u32 %v1665, 4294901760
        %1905 = vmatpush.msra.mxu0 %v1904
        %v1906 = vand.u32 %v1658, 4294901760
        %v1907 = vsub.f32 %v1658, %v1906
        %v1908 = vand.u32 %v1907, 4294901760
        %1909 = vmatmul.f32.gmra.mxu0 %v1908
        %v1910 = vpop.f32.mrf.mxu0
        %v1911 = vadd.f32 %v1887, %v1910
        %1912 = vdwg.mxu0
        %1913 = vmatpush.msra.mxu0 0.0
        %1914 = vmatpush.msra.mxu0 0.0
        %1915 = vmatpush.msra.mxu0 0.0
        %1916 = vmatpush.msra.mxu0 0.0
        %1917 = vmatpush.msra.mxu0 0.0
        %1918 = vmatpush.msra.mxu0 0.0
        %1919 = vmatpush.msra.mxu0 0.0
        %1920 = vmatpush.msra.mxu0 0.0
        %1921 = vmatpush.msra.mxu0 0.0
        %1922 = vmatpush.msra.mxu0 0.0
        %1923 = vmatpush.msra.mxu0 0.0
        %1924 = vmatpush.msra.mxu0 0.0
        %1925 = vmatpush.msra.mxu0 0.0
        %1926 = vmatpush.msra.mxu0 0.0
        %1927 = vmatpush.msra.mxu0 0.0
        %v1928 = vand.u32 %v1665, 4294901760
        %v1929 = vsub.f32 %v1665, %v1928
        %v1930 = vand.u32 %v1929, 4294901760
        %1931 = vmatpush.msra.mxu0 %v1930
        %v1932 = vand.u32 %v1658, 4294901760
        %1933 = vmatmul.f32.gmra.mxu0 %v1932
        %v1934 = vpop.f32.mrf.mxu0
        %v1935 = vadd.f32 %v1911, %v1934
        %1936 = vdwg.mxu0
        %1937 = vmatpush.msra.mxu0 0.0
        %1938 = vmatpush.msra.mxu0 0.0
        %1939 = vmatpush.msra.mxu0 0.0
        %1940 = vmatpush.msra.mxu0 0.0
        %1941 = vmatpush.msra.mxu0 0.0
        %1942 = vmatpush.msra.mxu0 0.0
        %1943 = vmatpush.msra.mxu0 0.0
        %1944 = vmatpush.msra.mxu0 0.0
        %1945 = vmatpush.msra.mxu0 0.0
        %1946 = vmatpush.msra.mxu0 0.0
        %1947 = vmatpush.msra.mxu0 0.0
        %1948 = vmatpush.msra.mxu0 0.0
        %1949 = vmatpush.msra.mxu0 0.0
        %1950 = vmatpush.msra.mxu0 0.0
        %1951 = vmatpush.msra.mxu0 0.0
        %v1952 = vand.u32 %v1665, 4294901760
        %1953 = vmatpush.msra.mxu0 %v1952
        %v1954 = vand.u32 %v1658, 4294901760
        %1955 = vmatmul.f32.gmra.mxu0 %v1954
        %v1956 = vpop.f32.mrf.mxu0
        %v1957 = vadd.f32 %v1935, %v1956
        %1958 = vdwg.mxu0
        %v1961 = vrot.slane %v1957, 4
        %v1962 = vsel %vm1660, %v1811, %v1961
        %1964 = vst [vmem:[%s219] sm:$0xff] %v1962
        %s1965 = sand.u32 %s97, 1
        %s1966 = scalar_lea.sflag [#allocation4], %s1965
        %s1967 = sand.u32 %s97, 1
        %s1968 = smul.addr %s1967, 8
        %s1969 = scalar_lea.vmem [#allocation8], %s1968
        // Predicated region
        $region45: #{tpu_custom_call.1} parent=31 // pred_check
          %p1970 = pneg %p107
        $region46: #{tpu_custom_call.1} parent=31 // pred_check_branch
          %1972 = sbr.rel (%p1970) target = $region48
        $region47: #{tpu_custom_call.1} parent=31 // pred_region
          %1974 = vsyncadd %s1966, 0
          %s1975 = smul.addr %s21, 2
          %s1976 = smul.addr %s1975, 4
          %s1977 = scalar_lea.hbm %s3, %s1976
          %s1979 = sshll.u32 %s1969, 4
          %s1980 = int_to_ptr.vmem [resolvable:$true] %s1979
          %s1981 = sshll.u32 %s1977, 4
          %s1982 = int_to_ptr.hbm [resolvable:$true] %s1981
          %1984 = dma.vmem_to_hbm [thread:$0]  %s1980, 128, %s1982, %s1966
        $region48: #{tpu_custom_call.1} parent=31 // pred_fallthru
          _
      $region32: #{tpu_custom_call.1} parent=5 // pred_fallthru
        _
      %p1985 = scmp.le.s32.totalorder 2, %s16
      // Predicated region
      $region49: #{tpu_custom_call.1} parent=5 // pred_check
        %p1986 = pneg %p1985
      $region50: #{tpu_custom_call.1} parent=5 // pred_check_branch
        %1988 = sbr.rel (%p1986) target = $region52
      $region51: #{tpu_custom_call.1} parent=5 // pred_region
        %s1989 = ssub.s32 %s16, 2
        // Predicated region
        $region53: #{tpu_custom_call.1} parent=51 // pred_check
          %p1990 = pneg %p113
        $region54: #{tpu_custom_call.1} parent=51 // pred_check_branch
          %1992 = sbr.rel (%p1990) target = $region56
        $region55: #{tpu_custom_call.1} parent=51 // pred_region
          %s1993 = sand.u32 %s98, 1
          %s1994 = scalar_lea.sflag [#allocation4], %s1993
          %s1995 = sand.u32 %s98, 1
          %s1996 = smul.addr %s1995, 8
          %s1997 = scalar_lea.vmem [#allocation8], %s1996
          %1999 = dma.done %s1994, 128
        $region56: #{tpu_custom_call.1} parent=51 // pred_fallthru
          _
      $region52: #{tpu_custom_call.1} parent=5 // pred_fallthru
        _
    $region6: #{tpu_custom_call.1} parent=1 // loop_footer
      %s20 = sadd.s32 1, %s16
    $region7: #{tpu_custom_call.1} parent=1 // loop_footer_branch
      %15 = sbr.rel target = $region3
    $region8: #{tpu_custom_call.1} parent=1 // loop_exit
      _
    %2000 = vsyncpa [#allocation3], 1
    %s2001 = scalar_lea.sflag [#allocation3], 1
    %2002 = vsyncpa %s2001, 1
    %2003 = vsyncpa [#allocation6], 1
    %2004 = vsyncpa [#allocation4], 1
    %s2005 = scalar_lea.sflag [#allocation4], 1
    %2006 = vsyncpa %s2005, 1

</llo_original>
